<compile_context>
chip_gen: v6e
topology: v6e:2x2x1
jax: 0.10.0
libtpu: 0.0.40
codegen_flags: <defaults>
</compile_context>

<pallas_src>
import math
import functools

import jax
import jax.numpy as jnp
from jax import lax
from jax.experimental import pallas as pl
from jax.experimental.pallas import tpu as pltpu


def _round_up(x, m):
    return (x + m - 1) // m * m


def _vmem_limit_bytes():
    """Explicit scoped-VMEM limit: well above the conservative defaults
    (16 MiB v5e / 32 MiB v6e+v7x) but with headroom below physical."""
    try:
        phys = int(pltpu.get_tpu_info().vmem_capacity_bytes)
    except Exception:
        phys = 64 * 1024 * 1024          # v7x-safe fallback
    return int(max(32 * 1024 * 1024,
                   min(phys - 8 * 1024 * 1024, 100 * 1024 * 1024)))


# ----------------------------------------------------------------------------
# Kernel 1: fully parallel input projection  gates_x = x @ W + B
# ----------------------------------------------------------------------------
def _input_proj_kernel(x_ref, w_ref, b_ref, gx_ref):
    x = x_ref[...].astype(w_ref.dtype)
    gx = jnp.dot(x, w_ref[...], preferred_element_type=jnp.float32)
    gx_ref[...] = (gx + b_ref[...]).astype(gx_ref.dtype)


def _input_projection(x2, w, b2d, gx_dtype, vmem_limit):
    """x2: (rows, in), w: (in, 4*hp), b2d: (1, 4*hp) -> (rows, 4*hp) gx_dtype."""
    rows, in_size = x2.shape
    g4 = w.shape[1]

    # Gate-column tiling: bounded W / output blocks, 256+-wide MXU RHS panels.
    tn = g4
    for cand in (512, 256, 128):
        if g4 % cand == 0:
            tn = cand
            break

    # Row tiling: biggest tile whose double-buffered blocks fit the budget.
    x_b = jnp.dtype(x2.dtype).itemsize
    w_b = jnp.dtype(w.dtype).itemsize
    g_b = jnp.dtype(gx_dtype).itemsize
    budget = vmem_limit // 2
    tm = 8                                # rows is always a multiple of 8
    for cand in (1024, 512, 256, 128, 64, 32, 16, 8):
        if rows % cand:
            continue
        need = 2 * (cand * in_size * x_b + in_size * tn * w_b + cand * tn * g_b)
        if need <= budget:
            tm = cand
            break

    cost = pl.CostEstimate(
        flops=int(2 * rows * in_size * g4),
        transcendentals=0,
        bytes_accessed=int(rows * in_size * x_b + in_size * g4 * w_b
                           + g4 * 4 + rows * g4 * g_b),
    )
    return pl.pallas_call(
        _input_proj_kernel,
        out_shape=jax.ShapeDtypeStruct((rows, g4), gx_dtype),
        grid=(rows // tm, g4 // tn),
        in_specs=[
            pl.BlockSpec((tm, in_size), lambda i, j: (i, 0)),
            pl.BlockSpec((in_size, tn), lambda i, j: (0, j)),
            pl.BlockSpec((1, tn), lambda i, j: (0, j)),
        ],
        out_specs=pl.BlockSpec((tm, tn), lambda i, j: (i, j)),
        compiler_params=pltpu.CompilerParams(
            dimension_semantics=("parallel", "parallel"),
            vmem_limit_bytes=vmem_limit),
        cost_estimate=cost,
    )(x2, w, b2d)


# ----------------------------------------------------------------------------
# Kernel 2: recurrence  gates = gates_x[t] + h_{t-1} @ U ; cell update
# ----------------------------------------------------------------------------
def _lstm_recurrent_kernel(gx_ref, u_ref, h0_ref, c0_ref,
                           out_ref, cT_ref,
                           h_sc, c_sc, *, hidden_pad, t_blk, unroll, act_dtype):
    # Grid is (batch_blocks, time_blocks) iterated row-major, i.e. the TIME
    # axis is innermost.  The f32 (h, c) scratch carries state across time
    # blocks of one batch block and is re-initialised from h0/c0 at t == 0
    # (i.e. at the start of every batch block).  This relies on Pallas'
    # row-major grid iteration order.
    t = pl.program_id(1)

    @pl.when(t == 0)
    def _():
        h_sc[...] = h0_ref[...].astype(jnp.float32)
        c_sc[...] = c0_ref[...].astype(jnp.float32)

    u = u_ref[...]
    hs = hidden_pad

    def step(ti, carry):
        h_prev, c_prev = carry
        gates = gx_ref[ti].astype(jnp.float32) + jnp.dot(
            h_prev.astype(u.dtype), u, preferred_element_type=jnp.float32)
        acts = gates.astype(act_dtype)
        # One sigmoid dispatch over the contiguous i|f|o slab (lane aligned).
        ifo = jax.nn.sigmoid(acts[:, 0:3 * hs])
        g_t = jnp.tanh(acts[:, 3 * hs:4 * hs]).astype(jnp.float32)
        i_t = ifo[:, 0 * hs:1 * hs].astype(jnp.float32)
        f_t = ifo[:, 1 * hs:2 * hs].astype(jnp.float32)
        o_t = ifo[:, 2 * hs:3 * hs].astype(jnp.float32)
        c_t = f_t * c_prev + i_t * g_t
        h_t = o_t * jnp.tanh(c_t)
        out_ref[ti] = h_t.astype(out_ref.dtype)
        return h_t, c_t

    h_last, c_last = lax.fori_loop(
        0, t_blk, step, (h_sc[...], c_sc[...]), unroll=unroll)

    h_sc[...] = h_last
    c_sc[...] = c_last

    @pl.when(t == pl.num_programs(1) - 1)
    def _():
        cT_ref[...] = c_last.astype(cT_ref.dtype)


def _run_recurrence(gx, Uc, h0p, c0p, *, seq_len, bp, hp, batch_block, t_block,
                    out_dtype, gate_act_dtype, vmem_limit, single_buffer_u):
    nb = bp // batch_block
    nt = seq_len // t_block

    # Cap the unroll at 8 (largest divisor of t_block <= 8) to bound vreg use.
    unroll = 1
    for cand in (8, 4, 2, 1):
        if t_block % cand == 0:
            unroll = cand
            break

    kernel = functools.partial(
        _lstm_recurrent_kernel, hidden_pad=hp, t_blk=t_block,
        unroll=unroll, act_dtype=gate_act_dtype)

    # U never changes across the grid: single-buffer it so only one copy is
    # resident in VMEM (default double-buffering duplicates it for nothing).
    if single_buffer_u:
        u_spec = pl.BlockSpec((hp, 4 * hp), lambda b, t: (0, 0),
                              pipeline_mode=pl.Buffered(1))
    else:
        u_spec = pl.BlockSpec((hp, 4 * hp), lambda b, t: (0, 0))

    out_b = jnp.dtype(out_dtype).itemsize
    cost = pl.CostEstimate(
        flops=int(2 * seq_len * bp * hp * 4 * hp),
        transcendentals=int(5 * seq_len * bp * hp),
        bytes_accessed=int(gx.size * jnp.dtype(gx.dtype).itemsize
                           + Uc.size * jnp.dtype(Uc.dtype).itemsize
                           + seq_len * bp * hp * out_b
                           + 3 * bp * hp * out_b),
    )

    return pl.pallas_call(
        kernel,
        out_shape=(
            jax.ShapeDtypeStruct((seq_len, bp, hp), out_dtype),
            jax.ShapeDtypeStruct((bp, hp), out_dtype),
        ),
        grid=(nb, nt),
        in_specs=[
            pl.BlockSpec((t_block, batch_block, 4 * hp), lambda b, t: (t, b, 0)),
            u_spec,
            pl.BlockSpec((batch_block, hp), lambda b, t: (b, 0)),
            pl.BlockSpec((batch_block, hp), lambda b, t: (b, 0)),
        ],
        out_specs=[
            pl.BlockSpec((t_block, batch_block, hp), lambda b, t: (t, b, 0)),
            pl.BlockSpec((batch_block, hp), lambda b, t: (b, 0)),
        ],
        scratch_shapes=[
            pltpu.VMEM((batch_block, hp), jnp.float32),   # h state
            pltpu.VMEM((batch_block, hp), jnp.float32),   # c state
        ],
        compiler_params=pltpu.CompilerParams(
            dimension_semantics=("parallel", "arbitrary"),
            vmem_limit_bytes=vmem_limit),
        cost_estimate=cost,
    )(gx, Uc, h0p, c0p)


# ----------------------------------------------------------------------------
# Wrapper
# ----------------------------------------------------------------------------
def lstm_forward(x, W, U, B, state=None, *,
                 compute_dtype=jnp.bfloat16,    # bf16 weights + bf16 gates_x
                 gate_act_dtype=jnp.float32,    # bf16 OK on v6e/v7x, NOT v5e
                 t_block=None, batch_block=None, batch_shards=1):
    """x: (seq, batch, in); W: (in, 4H); U: (H, 4H); B: (4H,).
    Returns (hidden_seq (seq, batch, H), (h_T, c_T))."""
    seq_len, batch, input_size = x.shape
    hidden = U.shape[0]
    out_dtype = x.dtype
    vmem_limit = _vmem_limit_bytes()

    if state is None:
        h0 = jnp.zeros((batch, hidden), dtype=x.dtype)
        c0 = jnp.zeros((batch, hidden), dtype=x.dtype)
    else:
        h0, c0 = state

    hp = _round_up(hidden, 128)   # lane-aligned hidden size
    bp = _round_up(batch, 8)      # sublane-aligned batch

    # ---- zero padding (per gate block); mathematically inert ---------------
    def pad_gate_cols(m):
        if hp == hidden:
            return m
        lead = m.shape[:-1]
        m4 = m.reshape(lead + (4, hidden))
        m4 = jnp.pad(m4, [(0, 0)] * len(lead) + [(0, 0), (0, hp - hidden)])
        return m4.reshape(lead + (4 * hp,))

    Wp = pad_gate_cols(W)
    Up = pad_gate_cols(jnp.pad(U, ((0, hp - hidden), (0, 0))))
    Bp = pad_gate_cols(B.reshape(1, 4 * hidden)).astype(jnp.float32)
    h0p = jnp.pad(h0, ((0, bp - batch), (0, hp - hidden)))
    c0p = jnp.pad(c0, ((0, bp - batch), (0, hp - hidden)))
    xp = jnp.pad(x, ((0, 0), (0, bp - batch), (0, 0)))

    Wc = Wp.astype(compute_dtype)   # weights at MXU-native dtype
    Uc = Up.astype(compute_dtype)   # (accumulation stays f32 in-kernel)

    # gates_x is written by kernel 1 and re-read by kernel 2: storing it at
    # compute_dtype (bf16 by default) halves its HBM traffic.
    gx_dtype = jnp.dtype(compute_dtype)

    # ---- 1) hoisted, fully parallel input projection ------------------------
    gx = _input_projection(xp.reshape(seq_len * bp, input_size), Wc, Bp,
                           gx_dtype, vmem_limit)
    gx = gx.reshape(seq_len, bp, 4 * hp)

    # ---- 2) sequential recurrence -------------------------------------------
    # Batch blocking: keep the MXU M dimension as large as possible.  nb = 1 on
    # single-TC chips (v5e/v6e); batch_shards=2 on v7x gives each TensorCore an
    # independent recurrence via the "parallel" batch axis.
    if batch_block is None:
        if (batch_shards > 1 and bp % batch_shards == 0
                and (bp // batch_shards) % 8 == 0):
            batch_block = bp // batch_shards
        else:
            batch_block = bp
    assert bp % batch_block == 0 and batch_block % 8 == 0

    # Time blocking: amortize per-grid-step overhead; sized to fit VMEM
    # (gx in-block + hidden_seq out-block, both double-buffered).
    if t_block is None:
        per_t = (2 * batch_block * 4 * hp * jnp.dtype(gx_dtype).itemsize
                 + 2 * batch_block * hp * jnp.dtype(out_dtype).itemsize)
        t_cap = max(1, (vmem_limit // 3) // max(per_t, 1))
        t_block = 1
        for cand in (32, 16, 8, 4, 2):
            if seq_len % cand == 0 and cand <= t_cap:
                t_block = cand
                break
    assert seq_len % t_block == 0

    def run(single_buffer_u):
        return _run_recurrence(
            gx, Uc, h0p, c0p, seq_len=seq_len, bp=bp, hp=hp,
            batch_block=batch_block, t_block=t_block, out_dtype=out_dtype,
            gate_act_dtype=gate_act_dtype, vmem_limit=vmem_limit,
            single_buffer_u=single_buffer_u)

    try:
        hidden_seq_p, cT_p = run(True)
    except Exception:
        # pipeline_mode=pl.Buffered(1) not supported on this jax: fall back to
        # default double-buffering of U (correctness identical).
        hidden_seq_p, cT_p = run(False)

    hidden_seq = hidden_seq_p[:, :batch, :hidden]
    c_T = cT_p[:batch, :hidden]
    h_T = hidden_seq[-1]
    return hidden_seq, (h_T, c_T)


# ----------------------------------------------------------------------------
# Pure-JAX reference mirroring the PyTorch forward exactly
# ----------------------------------------------------------------------------
def lstm_reference(x, W, U, B, state=None):
    seq_len, batch, _ = x.shape
    hidden_size = U.shape[0]
    if state is None:
        h_t = jnp.zeros((batch, hidden_size), dtype=x.dtype)
        c_t = jnp.zeros((batch, hidden_size), dtype=x.dtype)
    else:
        h_t, c_t = state
    hs = hidden_size
    outs = []
    for t in range(seq_len):
        gates = x[t] @ W + h_t @ U + B
        i_t = jax.nn.sigmoid(gates[:, :hs])
        f_t = jax.nn.sigmoid(gates[:, hs:2 * hs])
        o_t = jax.nn.sigmoid(gates[:, 2 * hs:3 * hs])
        g_t = jnp.tanh(gates[:, 3 * hs:])
        c_t = f_t * c_t + i_t * g_t
        h_t = o_t * jnp.tanh(c_t)
        outs.append(h_t)
    return jnp.stack(outs, axis=0), (h_t, c_t)


if __name__ == "__main__":
    # Small shapes that still exercise padding (batch 12 -> 16, hidden 32 ->
    # 128) and multi-block time carry (seq 32 with t_block=8 -> 4 time blocks).
    seq_len, batch, input_size, hidden_size = 32, 12, 20, 32

    key = jax.random.PRNGKey(0)
    kx, kh, kc, kw, ku, kb = jax.random.split(key, 6)

    bound = 1.0 / math.sqrt(hidden_size)
    W = jax.random.uniform(kw, (input_size, 4 * hidden_size),
                           minval=-bound, maxval=bound, dtype=jnp.float32)
    U = jax.random.uniform(ku, (hidden_size, 4 * hidden_size),
                           minval=-bound, maxval=bound, dtype=jnp.float32)
    B = jax.random.uniform(kb, (4 * hidden_size,),
                           minval=-bound, maxval=bound, dtype=jnp.float32)

    x = jax.random.normal(kx, (seq_len, batch, input_size), dtype=jnp.float32)
    h0 = jax.random.normal(kh, (batch, hidden_size), dtype=jnp.float32)
    c0 = jax.random.normal(kc, (batch, hidden_size), dtype=jnp.float32)

    ref_seq, (ref_h, ref_c) = lstm_reference(x, W, U, B, state=(h0, c0))

    # Default (bf16 weights + bf16 gates_x, f32 accumulation), full batch block,
    # default time block.
    seq_bf, (h_bf, c_bf) = lstm_forward(x, W, U, B, state=(h0, c0))
    jax.block_until_ready((seq_bf, h_bf, c_bf))
    assert jnp.allclose(seq_bf, ref_seq, atol=5e-2, rtol=5e-2)
    assert jnp.allclose(h_bf, ref_h, atol=5e-2, rtol=5e-2)
    assert jnp.allclose(c_bf, ref_c, atol=5e-2, rtol=5e-2)

    # Full-f32 path; small t_block + batch_shards=2 exercises the multi-block
    # time carry and the (v7x-style) two-batch-shard grid.  Tight tolerance.
    seq_f32, (h_f32, c_f32) = lstm_forward(
        x, W, U, B, state=(h0, c0),
        compute_dtype=jnp.float32, t_block=8, batch_shards=2)
    jax.block_until_ready((seq_f32, h_f32, c_f32))
    assert jnp.allclose(seq_f32, ref_seq, atol=1e-4, rtol=1e-4)
    assert jnp.allclose(h_f32, ref_h, atol=1e-4, rtol=1e-4)
    assert jnp.allclose(c_f32, ref_c, atol=1e-4, rtol=1e-4)

    print("KERNEL_OK")
</pallas_src>

<mosaic_0001>
module attributes {stable_mosaic.version = 11 : i64} {
  func.func @_input_proj_kernel(%arg0: i32, %arg1: i32, %arg2: memref<512x20xf32, #tpu.memory_space<vmem>>, %arg3: memref<20x512xbf16, #tpu.memory_space<vmem>>, %arg4: memref<1x512xf32, #tpu.memory_space<vmem>>, %arg5: memref<512x512xbf16, #tpu.memory_space<vmem>>) attributes {dimension_semantics = [#tpu.dimension_semantics<parallel>, #tpu.dimension_semantics<parallel>], iteration_bounds = array<i64: 1, 1>, scalar_prefetch = 0 : i64, scratch_operands = 0 : i64, tpu.core_type = #tpu.core_type<tc>, window_params = [{transform_indices = @transform_0, window_bounds = array<i64: 512, 20>}, {transform_indices = @transform_1, window_bounds = array<i64: 20, 512>}, {transform_indices = @transform_2, window_bounds = array<i64: 1, 512>}, {transform_indices = @transform_3, window_bounds = array<i64: 512, 512>}]} {
    %c0 = arith.constant 0 : index
    %c0_0 = arith.constant 0 : index
    %0 = vector.load %arg2[%c0, %c0_0] : memref<512x20xf32, #tpu.memory_space<vmem>>, vector<512x20xf32>
    %1 = arith.truncf %0 : vector<512x20xf32> to vector<512x20xbf16>
    %c0_1 = arith.constant 0 : index
    %c0_2 = arith.constant 0 : index
    %2 = vector.load %arg3[%c0_1, %c0_2] : memref<20x512xbf16, #tpu.memory_space<vmem>>, vector<20x512xbf16>
    %cst = arith.constant dense<0.000000e+00> : vector<512x512xf32>
    %3 = tpu.matmul %1, %2, %cst {dimension_numbers = #tpu.dot_dimension_numbers<[1], [0], [0], [1], [0, 0, 1, 1], [], []>} : vector<512x20xbf16>, vector<20x512xbf16>, vector<512x512xf32> -> vector<512x512xf32>
    %c0_3 = arith.constant 0 : index
    %c0_4 = arith.constant 0 : index
    %4 = vector.load %arg4[%c0_3, %c0_4] : memref<1x512xf32, #tpu.memory_space<vmem>>, vector<1x512xf32>
    %5 = vector.broadcast %4 : vector<1x512xf32> to vector<512x512xf32>
    %6 = arith.addf %3, %5 : vector<512x512xf32>
    %7 = arith.truncf %6 : vector<512x512xf32> to vector<512x512xbf16>
    %c0_5 = arith.constant 0 : index
    %c0_6 = arith.constant 0 : index
    %8 = vector.load %arg5[%c0_5, %c0_6] : memref<512x512xbf16, #tpu.memory_space<vmem>>, vector<512x512xbf16>
    tpu.vector_store %arg5[%c0_5, %c0_6], %7 {strides = array<i32>} : memref<512x512xbf16, #tpu.memory_space<vmem>>, vector<512x512xbf16>,
    return
  }
  func.func @transform_0(%arg0: i32, %arg1: i32) -> (i32, i32) {
    %c0_i32 = arith.constant 0 : i32
    %c0_i32_0 = arith.constant 0 : i32
    return %arg0, %c0_i32 : i32, i32
  }
  func.func @transform_1(%arg0: i32, %arg1: i32) -> (i32, i32) {
    %c0_i32 = arith.constant 0 : i32
    %c0_i32_0 = arith.constant 0 : i32
    return %c0_i32, %arg1 : i32, i32
  }
  func.func @transform_2(%arg0: i32, %arg1: i32) -> (i32, i32) {
    %c0_i32 = arith.constant 0 : i32
    %c0_i32_0 = arith.constant 0 : i32
    return %c0_i32, %arg1 : i32, i32
  }
  func.func @transform_3(%arg0: i32, %arg1: i32) -> (i32, i32) {
    %c0_i32 = arith.constant 0 : i32
    return %arg0, %arg1 : i32, i32
  }
}

</mosaic_0001>

<llo_original>
// kernel: tpu_custom_call.1
$region0: #{tpu_custom_call.1}
  #allocation0 [shape = 'u32[]', space=smem, size = 0x4, offset = 0x4, fixed_abs, tag = 'smem constant byte address 0x4 - core index']
  #allocation1 [shape = 'u32[144,128]{1,0:T(1,128)}', space=vmem, size = 0x12000, scoped, tag = 'internal scratch']
  %s0 = inlined_call_operand.vmem [shape: f32[512,20], index: 0, kind: input, shape index: {}]
  %s1 = inlined_call_operand.vmem [shape: bf16[20,512], index: 1, kind: input, shape index: {}]
  %s2 = inlined_call_operand.vmem [shape: f32[1,512], index: 2, kind: input, shape index: {}]
  %s3 = inlined_call_operand.hbm [shape: bf16[512,512], index: 3, kind: output, shape index: {}]
  %s4 = sld [smem:[#allocation0]]
  $region22: #{tpu_custom_call.1} parent=0
    _
  %s6 = ssub.s32 1, %s4
  %s7 = scalar_select 0, %s6, %s4
  $region1: #{tpu_custom_call.1} parent=0
    #allocation2 [shape = 'u8[524288]{0}', space=vmem, size = 0x80000, scoped, tag = 'output window, operand 0, single buffered']
    #allocation3 [shape = 's32[1]{0}', space=sflag, size = 0x4, scoped, tag = 'scoped memory for tpu_custom_call.1']
    %8 = vsyncpa [#allocation3], 0
    // Predicated region
    $region2: #{tpu_custom_call.1} parent=1 // pred_check
      _
    $region3: #{tpu_custom_call.1} parent=1 // pred_check_branch
      %10 = sbr.rel (0) target = $region5
    $region4: #{tpu_custom_call.1} parent=1 // pred_region
      _
    $region5: #{tpu_custom_call.1} parent=1 // pred_fallthru
      _
    // Predicated region
    $region6: #{tpu_custom_call.1} parent=1 // pred_check
      _
    $region7: #{tpu_custom_call.1} parent=1 // pred_check_branch
      %12 = sbr.rel (0) target = $region9
    $region8: #{tpu_custom_call.1} parent=1 // pred_region
      _
    $region9: #{tpu_custom_call.1} parent=1 // pred_fallthru
      _
    // Predicated region
    $region10: #{tpu_custom_call.1} parent=1 // pred_check
      _
    $region11: #{tpu_custom_call.1} parent=1 // pred_check_branch
      %14 = sbr.rel (0) target = $region13
    $region12: #{tpu_custom_call.1} parent=1 // pred_region
      _
    $region13: #{tpu_custom_call.1} parent=1 // pred_fallthru
      _
    %v16 = vld [vmem:[%s0] sm:$0xff]
    %v17 = vld [vmem:[%s0 + $0x8] sm:$0xff]
    %v18 = vld [vmem:[%s0 + $0x10] sm:$0xff]
    %v19 = vld [vmem:[%s0 + $0x18] sm:$0xff]
    %v20 = vld [vmem:[%s0 + $0x20] sm:$0xff]
    %v21 = vld [vmem:[%s0 + $0x28] sm:$0xff]
    %v22 = vld [vmem:[%s0 + $0x30] sm:$0xff]
    %v23 = vld [vmem:[%s0 + $0x38] sm:$0xff]
    %v24 = vld [vmem:[%s0 + $0x40] sm:$0xff]
    %v25 = vld [vmem:[%s0 + $0x48] sm:$0xff]
    %v26 = vld [vmem:[%s0 + $0x50] sm:$0xff]
    %v27 = vld [vmem:[%s0 + $0x58] sm:$0xff]
    %v28 = vld [vmem:[%s0 + $0x60] sm:$0xff]
    %v29 = vld [vmem:[%s0 + $0x68] sm:$0xff]
    %v30 = vld [vmem:[%s0 + $0x70] sm:$0xff]
    %v31 = vld [vmem:[%s0 + $0x78] sm:$0xff]
    %v32 = vld [vmem:[%s0 + $0x80] sm:$0xff]
    %v33 = vld [vmem:[%s0 + $0x88] sm:$0xff]
    %v34 = vld [vmem:[%s0 + $0x90] sm:$0xff]
    %v35 = vld [vmem:[%s0 + $0x98] sm:$0xff]
    %v36 = vld [vmem:[%s0 + $0xa0] sm:$0xff]
    %v37 = vld [vmem:[%s0 + $0xa8] sm:$0xff]
    %v38 = vld [vmem:[%s0 + $0xb0] sm:$0xff]
    %v39 = vld [vmem:[%s0 + $0xb8] sm:$0xff]
    %v40 = vld [vmem:[%s0 + $0xc0] sm:$0xff]
    %v41 = vld [vmem:[%s0 + $0xc8] sm:$0xff]
    %v42 = vld [vmem:[%s0 + $0xd0] sm:$0xff]
    %v43 = vld [vmem:[%s0 + $0xd8] sm:$0xff]
    %v44 = vld [vmem:[%s0 + $0xe0] sm:$0xff]
    %v45 = vld [vmem:[%s0 + $0xe8] sm:$0xff]
    %v46 = vld [vmem:[%s0 + $0xf0] sm:$0xff]
    %v47 = vld [vmem:[%s0 + $0xf8] sm:$0xff]
    %v48 = vld [vmem:[%s0 + $0x100] sm:$0xff]
    %v49 = vld [vmem:[%s0 + $0x108] sm:$0xff]
    %v50 = vld [vmem:[%s0 + $0x110] sm:$0xff]
    %v51 = vld [vmem:[%s0 + $0x118] sm:$0xff]
    %v52 = vld [vmem:[%s0 + $0x120] sm:$0xff]
    %v53 = vld [vmem:[%s0 + $0x128] sm:$0xff]
    %v54 = vld [vmem:[%s0 + $0x130] sm:$0xff]
    %v55 = vld [vmem:[%s0 + $0x138] sm:$0xff]
    %v56 = vld [vmem:[%s0 + $0x140] sm:$0xff]
    %v57 = vld [vmem:[%s0 + $0x148] sm:$0xff]
    %v58 = vld [vmem:[%s0 + $0x150] sm:$0xff]
    %v59 = vld [vmem:[%s0 + $0x158] sm:$0xff]
    %v60 = vld [vmem:[%s0 + $0x160] sm:$0xff]
    %v61 = vld [vmem:[%s0 + $0x168] sm:$0xff]
    %v62 = vld [vmem:[%s0 + $0x170] sm:$0xff]
    %v63 = vld [vmem:[%s0 + $0x178] sm:$0xff]
    %v64 = vld [vmem:[%s0 + $0x180] sm:$0xff]
    %v65 = vld [vmem:[%s0 + $0x188] sm:$0xff]
    %v66 = vld [vmem:[%s0 + $0x190] sm:$0xff]
    %v67 = vld [vmem:[%s0 + $0x198] sm:$0xff]
    %v68 = vld [vmem:[%s0 + $0x1a0] sm:$0xff]
    %v69 = vld [vmem:[%s0 + $0x1a8] sm:$0xff]
    %v70 = vld [vmem:[%s0 + $0x1b0] sm:$0xff]
    %v71 = vld [vmem:[%s0 + $0x1b8] sm:$0xff]
    %v72 = vld [vmem:[%s0 + $0x1c0] sm:$0xff]
    %v73 = vld [vmem:[%s0 + $0x1c8] sm:$0xff]
    %v74 = vld [vmem:[%s0 + $0x1d0] sm:$0xff]
    %v75 = vld [vmem:[%s0 + $0x1d8] sm:$0xff]
    %v76 = vld [vmem:[%s0 + $0x1e0] sm:$0xff]
    %v77 = vld [vmem:[%s0 + $0x1e8] sm:$0xff]
    %v78 = vld [vmem:[%s0 + $0x1f0] sm:$0xff]
    %v79 = vld [vmem:[%s0 + $0x1f8] sm:$0xff]
    %v80 = vpack.c.bf16 %v17, %v16
    %v81 = vpack.c.bf16 %v19, %v18
    %v82 = vpack.c.bf16 %v21, %v20
    %v83 = vpack.c.bf16 %v23, %v22
    %v84 = vpack.c.bf16 %v25, %v24
    %v85 = vpack.c.bf16 %v27, %v26
    %v86 = vpack.c.bf16 %v29, %v28
    %v87 = vpack.c.bf16 %v31, %v30
    %v88 = vpack.c.bf16 %v33, %v32
    %v89 = vpack.c.bf16 %v35, %v34
    %v90 = vpack.c.bf16 %v37, %v36
    %v91 = vpack.c.bf16 %v39, %v38
    %v92 = vpack.c.bf16 %v41, %v40
    %v93 = vpack.c.bf16 %v43, %v42
    %v94 = vpack.c.bf16 %v45, %v44
    %v95 = vpack.c.bf16 %v47, %v46
    %v96 = vpack.c.bf16 %v49, %v48
    %v97 = vpack.c.bf16 %v51, %v50
    %v98 = vpack.c.bf16 %v53, %v52
    %v99 = vpack.c.bf16 %v55, %v54
    %v100 = vpack.c.bf16 %v57, %v56
    %v101 = vpack.c.bf16 %v59, %v58
    %v102 = vpack.c.bf16 %v61, %v60
    %v103 = vpack.c.bf16 %v63, %v62
    %v104 = vpack.c.bf16 %v65, %v64
    %v105 = vpack.c.bf16 %v67, %v66
    %v106 = vpack.c.bf16 %v69, %v68
    %v107 = vpack.c.bf16 %v71, %v70
    %v108 = vpack.c.bf16 %v73, %v72
    %v109 = vpack.c.bf16 %v75, %v74
    %v110 = vpack.c.bf16 %v77, %v76
    %v111 = vpack.c.bf16 %v79, %v78
    %v112 = vld [vmem:[%s1] sm:$0xff]
    %v113 = vld [vmem:[%s1 + $0x8] sm:$0xff]
    %v114 = vld [vmem:[%s1 + $0x10] sm:$0xff]
    %v115 = vld [vmem:[%s1 + $0x18] sm:$0xff]
    %v116 = vld [vmem:[%s1 + $0x20] sm:$0x33]
    %v117 = vld [vmem:[%s1 + $0x28] sm:$0x33]
    %v118 = vld [vmem:[%s2] sm:$0xf]
    %v120 = vlaneseq
    %v121 = vshrl.u32 %v120, 7
    %v122 = vsub.s32 0, %v121
    %v123 = vrot.slane %v118, %v122
    %v124 = vlaneseq
    %v125 = vshrl.u32 %v124, 7
    %v126 = vsub.s32 1, %v125
    %v127 = vrot.slane %v118, %v126
    %v128 = vlaneseq
    %v129 = vshrl.u32 %v128, 7
    %v130 = vsub.s32 2, %v129
    %v131 = vrot.slane %v118, %v130
    %v132 = vlaneseq
    %v133 = vshrl.u32 %v132, 7
    %v134 = vsub.s32 3, %v133
    %v135 = vrot.slane %v118, %v134
    %v146 = vunpack.c.l.b16 %v112
    %v147 = vunpack.c.h.b16 %v112
    %v148 = vunpack.c.l.b16 %v113
    %v149 = vunpack.c.h.b16 %v113
    %v150 = vunpack.c.l.b16 %v114
    %v151 = vunpack.c.h.b16 %v114
    %v152 = vunpack.c.l.b16 %v115
    %v153 = vunpack.c.h.b16 %v115
    %v154 = vunpack.c.l.b16 %v116
    %v155 = vunpack.c.h.b16 %v116
    %v156 = vunpack.c.l.b16 %v117
    %v157 = vunpack.c.h.b16 %v117
    %v158 = vpack.c.b16 %v150, %v146
    %v159 = vpack.c.b16 %v151, %v147
    %v160 = vpack.c.b16 %v152, %v148
    %v161 = vpack.c.b16 %v153, %v149
    %v162 = vpack.c.b16 %v154, %v154
    %v163 = vpack.c.b16 %v155, %v155
    %v164 = vpack.c.b16 %v156, %v156
    %v165 = vpack.c.b16 %v157, %v157
    %vm170 = vcmask 162816
    %v172 = vsel %vm170, %v80, 0
    %v175 = vsel %vm170, %v81, 0
    %v178 = vsel %vm170, %v82, 0
    %v181 = vsel %vm170, %v83, 0
    %v184 = vsel %vm170, %v84, 0
    %v187 = vsel %vm170, %v85, 0
    %v190 = vsel %vm170, %v86, 0
    %v193 = vsel %vm170, %v87, 0
    %v196 = vsel %vm170, %v88, 0
    %v199 = vsel %vm170, %v89, 0
    %v202 = vsel %vm170, %v90, 0
    %v205 = vsel %vm170, %v91, 0
    %v208 = vsel %vm170, %v92, 0
    %v211 = vsel %vm170, %v93, 0
    %v214 = vsel %vm170, %v94, 0
    %v217 = vsel %vm170, %v95, 0
    %v220 = vsel %vm170, %v96, 0
    %v223 = vsel %vm170, %v97, 0
    %v226 = vsel %vm170, %v98, 0
    %v229 = vsel %vm170, %v99, 0
    %v232 = vsel %vm170, %v100, 0
    %v235 = vsel %vm170, %v101, 0
    %v238 = vsel %vm170, %v102, 0
    %v241 = vsel %vm170, %v103, 0
    %v244 = vsel %vm170, %v104, 0
    %v247 = vsel %vm170, %v105, 0
    %v250 = vsel %vm170, %v106, 0
    %v253 = vsel %vm170, %v107, 0
    %v256 = vsel %vm170, %v108, 0
    %v259 = vsel %vm170, %v109, 0
    %v262 = vsel %vm170, %v110, 0
    %v265 = vsel %vm170, %v111, 0
    %vm267 = vcmask 1041408
    %v269 = vsel %vm267, %v162, 0
    %v272 = vsel %vm267, %v163, 0
    %v275 = vsel %vm267, %v164, 0
    %v278 = vsel %vm267, %v165, 0
    %280 = vmatprep.subr.bf16.mxu0 0
    %281 = vmatpush1.bf16.msra.mxu0 0
    %282 = vmatprep.subr.bf16.mxu0 0
    %283 = vmatpush1.bf16.msra.mxu0 0
    %284 = vmatprep.subr.bf16.mxu0 0
    %285 = vmatpush1.bf16.msra.mxu0 0
    %286 = vmatprep.subr.bf16.mxu0 0
    %287 = vmatpush1.bf16.msra.mxu0 0
    %288 = vmatprep.subr.bf16.mxu0 0
    %289 = vmatpush1.bf16.msra.mxu0 0
    %290 = vmatprep.subr.bf16.mxu0 0
    %291 = vmatpush1.bf16.msra.mxu0 0
    %292 = vmatprep.subr.bf16.mxu0 %v272
    %293 = vmatpush1.bf16.msra.mxu0 %v269
    %294 = vmatprep.subr.bf16.mxu0 %v159
    %295 = vmatpush1.bf16.msra.mxu0 %v158
    %296 = vmatprep.subr.bf16.mxu0 0
    %297 = vmatpush2.bf16.msra.mxu0 0
    %298 = vmatprep.subr.bf16.mxu0 0
    %299 = vmatpush2.bf16.msra.mxu0 0
    %300 = vmatprep.subr.bf16.mxu0 0
    %301 = vmatpush2.bf16.msra.mxu0 0
    %302 = vmatprep.subr.bf16.mxu0 0
    %303 = vmatpush2.bf16.msra.mxu0 0
    %304 = vmatprep.subr.bf16.mxu0 0
    %305 = vmatpush2.bf16.msra.mxu0 0
    %306 = vmatprep.subr.bf16.mxu0 0
    %307 = vmatpush2.bf16.msra.mxu0 0
    %308 = vmatprep.subr.bf16.mxu0 0
    %309 = vmatpush2.bf16.msra.mxu0 0
    %310 = vmatprep.subr.bf16.mxu0 0
    %311 = vmatpush2.bf16.msra.mxu0 0
    %312 = vmatprep.mubr.bf16.mxu0 0
    %313 = vmatmul.mubr.bf16.gmra.mxu0 %v172
    %v314 = vpop.f32.mrf.mxu0
    %v315 = vadd.f32 %v123, %v314
    %v316 = vpop.f32.mrf.mxu0
    %v317 = vadd.f32 %v127, %v316
    %v318 = vpop.f32.mrf.mxu0
    %v319 = vadd.f32 %v123, %v318
    %v320 = vpop.f32.mrf.mxu0
    %v321 = vadd.f32 %v127, %v320
    %322 = vmatprep.mubr.bf16.mxu0 0
    %323 = vmatmul.mubr.bf16.gmra.mxu0 %v175
    %v324 = vpop.f32.mrf.mxu0
    %v325 = vadd.f32 %v123, %v324
    %v326 = vpop.f32.mrf.mxu0
    %v327 = vadd.f32 %v127, %v326
    %v328 = vpop.f32.mrf.mxu0
    %v329 = vadd.f32 %v123, %v328
    %v330 = vpop.f32.mrf.mxu0
    %v331 = vadd.f32 %v127, %v330
    %332 = vmatprep.mubr.bf16.mxu0 0
    %333 = vmatmul.mubr.bf16.gmra.mxu0 %v178
    %v334 = vpop.f32.mrf.mxu0
    %v335 = vadd.f32 %v123, %v334
    %v336 = vpop.f32.mrf.mxu0
    %v337 = vadd.f32 %v127, %v336
    %v338 = vpop.f32.mrf.mxu0
    %v339 = vadd.f32 %v123, %v338
    %v340 = vpop.f32.mrf.mxu0
    %v341 = vadd.f32 %v127, %v340
    %342 = vmatprep.mubr.bf16.mxu0 0
    %343 = vmatmul.mubr.bf16.gmra.mxu0 %v181
    %v344 = vpop.f32.mrf.mxu0
    %v345 = vadd.f32 %v123, %v344
    %v346 = vpop.f32.mrf.mxu0
    %v347 = vadd.f32 %v127, %v346
    %v348 = vpop.f32.mrf.mxu0
    %v349 = vadd.f32 %v123, %v348
    %v350 = vpop.f32.mrf.mxu0
    %v351 = vadd.f32 %v127, %v350
    %352 = vmatprep.mubr.bf16.mxu0 0
    %353 = vmatmul.mubr.bf16.gmra.mxu0 %v184
    %v354 = vpop.f32.mrf.mxu0
    %v355 = vadd.f32 %v123, %v354
    %v356 = vpop.f32.mrf.mxu0
    %v357 = vadd.f32 %v127, %v356
    %v358 = vpop.f32.mrf.mxu0
    %v359 = vadd.f32 %v123, %v358
    %v360 = vpop.f32.mrf.mxu0
    %v361 = vadd.f32 %v127, %v360
    %362 = vmatprep.mubr.bf16.mxu0 0
    %363 = vmatmul.mubr.bf16.gmra.mxu0 %v187
    %v364 = vpop.f32.mrf.mxu0
    %v365 = vadd.f32 %v123, %v364
    %v366 = vpop.f32.mrf.mxu0
    %v367 = vadd.f32 %v127, %v366
    %v368 = vpop.f32.mrf.mxu0
    %v369 = vadd.f32 %v123, %v368
    %v370 = vpop.f32.mrf.mxu0
    %v371 = vadd.f32 %v127, %v370
    %372 = vmatprep.mubr.bf16.mxu0 0
    %373 = vmatmul.mubr.bf16.gmra.mxu0 %v190
    %v374 = vpop.f32.mrf.mxu0
    %v375 = vadd.f32 %v123, %v374
    %v376 = vpop.f32.mrf.mxu0
    %v377 = vadd.f32 %v127, %v376
    %v378 = vpop.f32.mrf.mxu0
    %v379 = vadd.f32 %v123, %v378
    %v380 = vpop.f32.mrf.mxu0
    %v381 = vadd.f32 %v127, %v380
    %382 = vmatprep.mubr.bf16.mxu0 0
    %383 = vmatmul.mubr.bf16.gmra.mxu0 %v193
    %v384 = vpop.f32.mrf.mxu0
    %v385 = vadd.f32 %v123, %v384
    %v386 = vpop.f32.mrf.mxu0
    %v387 = vadd.f32 %v127, %v386
    %v388 = vpop.f32.mrf.mxu0
    %v389 = vadd.f32 %v123, %v388
    %v390 = vpop.f32.mrf.mxu0
    %v391 = vadd.f32 %v127, %v390
    %392 = vmatprep.mubr.bf16.mxu0 0
    %393 = vmatmul.mubr.bf16.gmra.mxu0 %v196
    %v394 = vpop.f32.mrf.mxu0
    %v395 = vadd.f32 %v123, %v394
    %v396 = vpop.f32.mrf.mxu0
    %v397 = vadd.f32 %v127, %v396
    %v398 = vpop.f32.mrf.mxu0
    %v399 = vadd.f32 %v123, %v398
    %v400 = vpop.f32.mrf.mxu0
    %v401 = vadd.f32 %v127, %v400
    %402 = vmatprep.mubr.bf16.mxu0 0
    %403 = vmatmul.mubr.bf16.gmra.mxu0 %v199
    %v404 = vpop.f32.mrf.mxu0
    %v405 = vadd.f32 %v123, %v404
    %v406 = vpop.f32.mrf.mxu0
    %v407 = vadd.f32 %v127, %v406
    %v408 = vpop.f32.mrf.mxu0
    %v409 = vadd.f32 %v123, %v408
    %v410 = vpop.f32.mrf.mxu0
    %v411 = vadd.f32 %v127, %v410
    %412 = vmatprep.mubr.bf16.mxu0 0
    %413 = vmatmul.mubr.bf16.gmra.mxu0 %v202
    %v414 = vpop.f32.mrf.mxu0
    %v415 = vadd.f32 %v123, %v414
    %v416 = vpop.f32.mrf.mxu0
    %v417 = vadd.f32 %v127, %v416
    %v418 = vpop.f32.mrf.mxu0
    %v419 = vadd.f32 %v123, %v418
    %v420 = vpop.f32.mrf.mxu0
    %v421 = vadd.f32 %v127, %v420
    %422 = vmatprep.mubr.bf16.mxu0 0
    %423 = vmatmul.mubr.bf16.gmra.mxu0 %v205
    %v424 = vpop.f32.mrf.mxu0
    %v425 = vadd.f32 %v123, %v424
    %v426 = vpop.f32.mrf.mxu0
    %v427 = vadd.f32 %v127, %v426
    %v428 = vpop.f32.mrf.mxu0
    %v429 = vadd.f32 %v123, %v428
    %v430 = vpop.f32.mrf.mxu0
    %v431 = vadd.f32 %v127, %v430
    %432 = vmatprep.mubr.bf16.mxu0 0
    %433 = vmatmul.mubr.bf16.gmra.mxu0 %v208
    %v434 = vpop.f32.mrf.mxu0
    %v435 = vadd.f32 %v123, %v434
    %v436 = vpop.f32.mrf.mxu0
    %v437 = vadd.f32 %v127, %v436
    %v438 = vpop.f32.mrf.mxu0
    %v439 = vadd.f32 %v123, %v438
    %v440 = vpop.f32.mrf.mxu0
    %v441 = vadd.f32 %v127, %v440
    %442 = vmatprep.mubr.bf16.mxu0 0
    %443 = vmatmul.mubr.bf16.gmra.mxu0 %v211
    %v444 = vpop.f32.mrf.mxu0
    %v445 = vadd.f32 %v123, %v444
    %v446 = vpop.f32.mrf.mxu0
    %v447 = vadd.f32 %v127, %v446
    %v448 = vpop.f32.mrf.mxu0
    %v449 = vadd.f32 %v123, %v448
    %v450 = vpop.f32.mrf.mxu0
    %v451 = vadd.f32 %v127, %v450
    %452 = vmatprep.mubr.bf16.mxu0 0
    %453 = vmatmul.mubr.bf16.gmra.mxu0 %v214
    %v454 = vpop.f32.mrf.mxu0
    %v455 = vadd.f32 %v123, %v454
    %v456 = vpop.f32.mrf.mxu0
    %v457 = vadd.f32 %v127, %v456
    %v458 = vpop.f32.mrf.mxu0
    %v459 = vadd.f32 %v123, %v458
    %v460 = vpop.f32.mrf.mxu0
    %v461 = vadd.f32 %v127, %v460
    %462 = vmatprep.mubr.bf16.mxu0 0
    %463 = vmatmul.mubr.bf16.gmra.mxu0 %v217
    %v464 = vpop.f32.mrf.mxu0
    %v465 = vadd.f32 %v123, %v464
    %v466 = vpop.f32.mrf.mxu0
    %v467 = vadd.f32 %v127, %v466
    %v468 = vpop.f32.mrf.mxu0
    %v469 = vadd.f32 %v123, %v468
    %v470 = vpop.f32.mrf.mxu0
    %v471 = vadd.f32 %v127, %v470
    %472 = vmatprep.mubr.bf16.mxu0 0
    %473 = vmatmul.mubr.bf16.gmra.mxu0 %v220
    %v474 = vpop.f32.mrf.mxu0
    %v475 = vadd.f32 %v123, %v474
    %v476 = vpop.f32.mrf.mxu0
    %v477 = vadd.f32 %v127, %v476
    %v478 = vpop.f32.mrf.mxu0
    %v479 = vadd.f32 %v123, %v478
    %v480 = vpop.f32.mrf.mxu0
    %v481 = vadd.f32 %v127, %v480
    %482 = vmatprep.mubr.bf16.mxu0 0
    %483 = vmatmul.mubr.bf16.gmra.mxu0 %v223
    %v484 = vpop.f32.mrf.mxu0
    %v485 = vadd.f32 %v123, %v484
    %v486 = vpop.f32.mrf.mxu0
    %v487 = vadd.f32 %v127, %v486
    %v488 = vpop.f32.mrf.mxu0
    %v489 = vadd.f32 %v123, %v488
    %v490 = vpop.f32.mrf.mxu0
    %v491 = vadd.f32 %v127, %v490
    %492 = vmatprep.mubr.bf16.mxu0 0
    %493 = vmatmul.mubr.bf16.gmra.mxu0 %v226
    %v494 = vpop.f32.mrf.mxu0
    %v495 = vadd.f32 %v123, %v494
    %v496 = vpop.f32.mrf.mxu0
    %v497 = vadd.f32 %v127, %v496
    %v498 = vpop.f32.mrf.mxu0
    %v499 = vadd.f32 %v123, %v498
    %v500 = vpop.f32.mrf.mxu0
    %v501 = vadd.f32 %v127, %v500
    %502 = vmatprep.mubr.bf16.mxu0 0
    %503 = vmatmul.mubr.bf16.gmra.mxu0 %v229
    %v504 = vpop.f32.mrf.mxu0
    %v505 = vadd.f32 %v123, %v504
    %v506 = vpop.f32.mrf.mxu0
    %v507 = vadd.f32 %v127, %v506
    %v508 = vpop.f32.mrf.mxu0
    %v509 = vadd.f32 %v123, %v508
    %v510 = vpop.f32.mrf.mxu0
    %v511 = vadd.f32 %v127, %v510
    %512 = vmatprep.mubr.bf16.mxu0 0
    %513 = vmatmul.mubr.bf16.gmra.mxu0 %v232
    %v514 = vpop.f32.mrf.mxu0
    %v515 = vadd.f32 %v123, %v514
    %v516 = vpop.f32.mrf.mxu0
    %v517 = vadd.f32 %v127, %v516
    %v518 = vpop.f32.mrf.mxu0
    %v519 = vadd.f32 %v123, %v518
    %v520 = vpop.f32.mrf.mxu0
    %v521 = vadd.f32 %v127, %v520
    %522 = vmatprep.mubr.bf16.mxu0 0
    %523 = vmatmul.mubr.bf16.gmra.mxu0 %v235
    %v524 = vpop.f32.mrf.mxu0
    %v525 = vadd.f32 %v123, %v524
    %v526 = vpop.f32.mrf.mxu0
    %v527 = vadd.f32 %v127, %v526
    %v528 = vpop.f32.mrf.mxu0
    %v529 = vadd.f32 %v123, %v528
    %v530 = vpop.f32.mrf.mxu0
    %v531 = vadd.f32 %v127, %v530
    %532 = vmatprep.mubr.bf16.mxu0 0
    %533 = vmatmul.mubr.bf16.gmra.mxu0 %v238
    %v534 = vpop.f32.mrf.mxu0
    %v535 = vadd.f32 %v123, %v534
    %v536 = vpop.f32.mrf.mxu0
    %v537 = vadd.f32 %v127, %v536
    %v538 = vpop.f32.mrf.mxu0
    %v539 = vadd.f32 %v123, %v538
    %v540 = vpop.f32.mrf.mxu0
    %v541 = vadd.f32 %v127, %v540
    %542 = vmatprep.mubr.bf16.mxu0 0
    %543 = vmatmul.mubr.bf16.gmra.mxu0 %v241
    %v544 = vpop.f32.mrf.mxu0
    %v545 = vadd.f32 %v123, %v544
    %v546 = vpop.f32.mrf.mxu0
    %v547 = vadd.f32 %v127, %v546
    %v548 = vpop.f32.mrf.mxu0
    %v549 = vadd.f32 %v123, %v548
    %v550 = vpop.f32.mrf.mxu0
    %v551 = vadd.f32 %v127, %v550
    %552 = vmatprep.mubr.bf16.mxu0 0
    %553 = vmatmul.mubr.bf16.gmra.mxu0 %v244
    %v554 = vpop.f32.mrf.mxu0
    %v555 = vadd.f32 %v123, %v554
    %v556 = vpop.f32.mrf.mxu0
    %v557 = vadd.f32 %v127, %v556
    %v558 = vpop.f32.mrf.mxu0
    %v559 = vadd.f32 %v123, %v558
    %v560 = vpop.f32.mrf.mxu0
    %v561 = vadd.f32 %v127, %v560
    %562 = vmatprep.mubr.bf16.mxu0 0
    %563 = vmatmul.mubr.bf16.gmra.mxu0 %v247
    %v564 = vpop.f32.mrf.mxu0
    %v565 = vadd.f32 %v123, %v564
    %v566 = vpop.f32.mrf.mxu0
    %v567 = vadd.f32 %v127, %v566
    %v568 = vpop.f32.mrf.mxu0
    %v569 = vadd.f32 %v123, %v568
    %v570 = vpop.f32.mrf.mxu0
    %v571 = vadd.f32 %v127, %v570
    %572 = vmatprep.mubr.bf16.mxu0 0
    %573 = vmatmul.mubr.bf16.gmra.mxu0 %v250
    %v574 = vpop.f32.mrf.mxu0
    %v575 = vadd.f32 %v123, %v574
    %v576 = vpop.f32.mrf.mxu0
    %v577 = vadd.f32 %v127, %v576
    %v578 = vpop.f32.mrf.mxu0
    %v579 = vadd.f32 %v123, %v578
    %v580 = vpop.f32.mrf.mxu0
    %v581 = vadd.f32 %v127, %v580
    %582 = vmatprep.mubr.bf16.mxu0 0
    %583 = vmatmul.mubr.bf16.gmra.mxu0 %v253
    %v584 = vpop.f32.mrf.mxu0
    %v585 = vadd.f32 %v123, %v584
    %v586 = vpop.f32.mrf.mxu0
    %v587 = vadd.f32 %v127, %v586
    %v588 = vpop.f32.mrf.mxu0
    %v589 = vadd.f32 %v123, %v588
    %v590 = vpop.f32.mrf.mxu0
    %v591 = vadd.f32 %v127, %v590
    %592 = vmatprep.mubr.bf16.mxu0 0
    %593 = vmatmul.mubr.bf16.gmra.mxu0 %v256
    %v594 = vpop.f32.mrf.mxu0
    %v595 = vadd.f32 %v123, %v594
    %v596 = vpop.f32.mrf.mxu0
    %v597 = vadd.f32 %v127, %v596
    %v598 = vpop.f32.mrf.mxu0
    %v599 = vadd.f32 %v123, %v598
    %v600 = vpop.f32.mrf.mxu0
    %v601 = vadd.f32 %v127, %v600
    %602 = vmatprep.mubr.bf16.mxu0 0
    %603 = vmatmul.mubr.bf16.gmra.mxu0 %v259
    %v604 = vpop.f32.mrf.mxu0
    %v605 = vadd.f32 %v123, %v604
    %v606 = vpop.f32.mrf.mxu0
    %v607 = vadd.f32 %v127, %v606
    %v608 = vpop.f32.mrf.mxu0
    %v609 = vadd.f32 %v123, %v608
    %v610 = vpop.f32.mrf.mxu0
    %v611 = vadd.f32 %v127, %v610
    %612 = vmatprep.mubr.bf16.mxu0 0
    %613 = vmatmul.mubr.bf16.gmra.mxu0 %v262
    %v614 = vpop.f32.mrf.mxu0
    %v615 = vadd.f32 %v123, %v614
    %v616 = vpop.f32.mrf.mxu0
    %v617 = vadd.f32 %v127, %v616
    %v618 = vpop.f32.mrf.mxu0
    %v619 = vadd.f32 %v123, %v618
    %v620 = vpop.f32.mrf.mxu0
    %v621 = vadd.f32 %v127, %v620
    %622 = vmatprep.mubr.bf16.mxu0 0
    %623 = vmatmul.mubr.bf16.gmra.mxu0 %v265
    %v624 = vpop.f32.mrf.mxu0
    %v625 = vadd.f32 %v123, %v624
    %v626 = vpop.f32.mrf.mxu0
    %v627 = vadd.f32 %v127, %v626
    %v628 = vpop.f32.mrf.mxu0
    %v629 = vadd.f32 %v123, %v628
    %v630 = vpop.f32.mrf.mxu0
    %v631 = vadd.f32 %v127, %v630
    %632 = vdwg.mxu0
    %633 = vmatprep.subr.bf16.mxu0 0
    %634 = vmatpush1.bf16.msra.mxu0 0
    %635 = vmatprep.subr.bf16.mxu0 0
    %636 = vmatpush1.bf16.msra.mxu0 0
    %637 = vmatprep.subr.bf16.mxu0 0
    %638 = vmatpush1.bf16.msra.mxu0 0
    %639 = vmatprep.subr.bf16.mxu0 0
    %640 = vmatpush1.bf16.msra.mxu0 0
    %641 = vmatprep.subr.bf16.mxu0 0
    %642 = vmatpush1.bf16.msra.mxu0 0
    %643 = vmatprep.subr.bf16.mxu0 0
    %644 = vmatpush1.bf16.msra.mxu0 0
    %645 = vmatprep.subr.bf16.mxu0 %v278
    %646 = vmatpush1.bf16.msra.mxu0 %v275
    %647 = vmatprep.subr.bf16.mxu0 %v161
    %648 = vmatpush1.bf16.msra.mxu0 %v160
    %649 = vmatprep.subr.bf16.mxu0 0
    %650 = vmatpush2.bf16.msra.mxu0 0
    %651 = vmatprep.subr.bf16.mxu0 0
    %652 = vmatpush2.bf16.msra.mxu0 0
    %653 = vmatprep.subr.bf16.mxu0 0
    %654 = vmatpush2.bf16.msra.mxu0 0
    %655 = vmatprep.subr.bf16.mxu0 0
    %656 = vmatpush2.bf16.msra.mxu0 0
    %657 = vmatprep.subr.bf16.mxu0 0
    %658 = vmatpush2.bf16.msra.mxu0 0
    %659 = vmatprep.subr.bf16.mxu0 0
    %660 = vmatpush2.bf16.msra.mxu0 0
    %661 = vmatprep.subr.bf16.mxu0 0
    %662 = vmatpush2.bf16.msra.mxu0 0
    %663 = vmatprep.subr.bf16.mxu0 0
    %664 = vmatpush2.bf16.msra.mxu0 0
    %665 = vmatprep.mubr.bf16.mxu0 0
    %666 = vmatmul.mubr.bf16.gmra.mxu0 %v172
    %v667 = vpop.f32.mrf.mxu0
    %v668 = vadd.f32 %v131, %v667
    %v669 = vpop.f32.mrf.mxu0
    %v670 = vadd.f32 %v135, %v669
    %v671 = vpop.f32.mrf.mxu0
    %v672 = vadd.f32 %v131, %v671
    %v673 = vpop.f32.mrf.mxu0
    %v674 = vadd.f32 %v135, %v673
    %675 = vmatprep.mubr.bf16.mxu0 0
    %676 = vmatmul.mubr.bf16.gmra.mxu0 %v175
    %v677 = vpop.f32.mrf.mxu0
    %v678 = vadd.f32 %v131, %v677
    %v679 = vpop.f32.mrf.mxu0
    %v680 = vadd.f32 %v135, %v679
    %v681 = vpop.f32.mrf.mxu0
    %v682 = vadd.f32 %v131, %v681
    %v683 = vpop.f32.mrf.mxu0
    %v684 = vadd.f32 %v135, %v683
    %685 = vmatprep.mubr.bf16.mxu0 0
    %686 = vmatmul.mubr.bf16.gmra.mxu0 %v178
    %v687 = vpop.f32.mrf.mxu0
    %v688 = vadd.f32 %v131, %v687
    %v689 = vpop.f32.mrf.mxu0
    %v690 = vadd.f32 %v135, %v689
    %v691 = vpop.f32.mrf.mxu0
    %v692 = vadd.f32 %v131, %v691
    %v693 = vpop.f32.mrf.mxu0
    %v694 = vadd.f32 %v135, %v693
    %695 = vmatprep.mubr.bf16.mxu0 0
    %696 = vmatmul.mubr.bf16.gmra.mxu0 %v181
    %v697 = vpop.f32.mrf.mxu0
    %v698 = vadd.f32 %v131, %v697
    %v699 = vpop.f32.mrf.mxu0
    %v700 = vadd.f32 %v135, %v699
    %v701 = vpop.f32.mrf.mxu0
    %v702 = vadd.f32 %v131, %v701
    %v703 = vpop.f32.mrf.mxu0
    %v704 = vadd.f32 %v135, %v703
    %705 = vmatprep.mubr.bf16.mxu0 0
    %706 = vmatmul.mubr.bf16.gmra.mxu0 %v184
    %v707 = vpop.f32.mrf.mxu0
    %v708 = vadd.f32 %v131, %v707
    %v709 = vpop.f32.mrf.mxu0
    %v710 = vadd.f32 %v135, %v709
    %v711 = vpop.f32.mrf.mxu0
    %v712 = vadd.f32 %v131, %v711
    %v713 = vpop.f32.mrf.mxu0
    %v714 = vadd.f32 %v135, %v713
    %715 = vmatprep.mubr.bf16.mxu0 0
    %716 = vmatmul.mubr.bf16.gmra.mxu0 %v187
    %v717 = vpop.f32.mrf.mxu0
    %v718 = vadd.f32 %v131, %v717
    %v719 = vpop.f32.mrf.mxu0
    %v720 = vadd.f32 %v135, %v719
    %v721 = vpop.f32.mrf.mxu0
    %v722 = vadd.f32 %v131, %v721
    %v723 = vpop.f32.mrf.mxu0
    %v724 = vadd.f32 %v135, %v723
    %725 = vmatprep.mubr.bf16.mxu0 0
    %726 = vmatmul.mubr.bf16.gmra.mxu0 %v190
    %v727 = vpop.f32.mrf.mxu0
    %v728 = vadd.f32 %v131, %v727
    %v729 = vpop.f32.mrf.mxu0
    %v730 = vadd.f32 %v135, %v729
    %v731 = vpop.f32.mrf.mxu0
    %v732 = vadd.f32 %v131, %v731
    %v733 = vpop.f32.mrf.mxu0
    %v734 = vadd.f32 %v135, %v733
    %735 = vmatprep.mubr.bf16.mxu0 0
    %736 = vmatmul.mubr.bf16.gmra.mxu0 %v193
    %v737 = vpop.f32.mrf.mxu0
    %v738 = vadd.f32 %v131, %v737
    %v739 = vpop.f32.mrf.mxu0
    %v740 = vadd.f32 %v135, %v739
    %v741 = vpop.f32.mrf.mxu0
    %v742 = vadd.f32 %v131, %v741
    %v743 = vpop.f32.mrf.mxu0
    %v744 = vadd.f32 %v135, %v743
    %745 = vmatprep.mubr.bf16.mxu0 0
    %746 = vmatmul.mubr.bf16.gmra.mxu0 %v196
    %v747 = vpop.f32.mrf.mxu0
    %v748 = vadd.f32 %v131, %v747
    %v749 = vpop.f32.mrf.mxu0
    %v750 = vadd.f32 %v135, %v749
    %v751 = vpop.f32.mrf.mxu0
    %v752 = vadd.f32 %v131, %v751
    %v753 = vpop.f32.mrf.mxu0
    %v754 = vadd.f32 %v135, %v753
    %755 = vmatprep.mubr.bf16.mxu0 0
    %756 = vmatmul.mubr.bf16.gmra.mxu0 %v199
    %v757 = vpop.f32.mrf.mxu0
    %v758 = vadd.f32 %v131, %v757
    %v759 = vpop.f32.mrf.mxu0
    %v760 = vadd.f32 %v135, %v759
    %v761 = vpop.f32.mrf.mxu0
    %v762 = vadd.f32 %v131, %v761
    %v763 = vpop.f32.mrf.mxu0
    %v764 = vadd.f32 %v135, %v763
    %765 = vmatprep.mubr.bf16.mxu0 0
    %766 = vmatmul.mubr.bf16.gmra.mxu0 %v202
    %v767 = vpop.f32.mrf.mxu0
    %v768 = vadd.f32 %v131, %v767
    %v769 = vpop.f32.mrf.mxu0
    %v770 = vadd.f32 %v135, %v769
    %v771 = vpop.f32.mrf.mxu0
    %v772 = vadd.f32 %v131, %v771
    %v773 = vpop.f32.mrf.mxu0
    %v774 = vadd.f32 %v135, %v773
    %775 = vmatprep.mubr.bf16.mxu0 0
    %776 = vmatmul.mubr.bf16.gmra.mxu0 %v205
    %v777 = vpop.f32.mrf.mxu0
    %v778 = vadd.f32 %v131, %v777
    %v779 = vpop.f32.mrf.mxu0
    %v780 = vadd.f32 %v135, %v779
    %v781 = vpop.f32.mrf.mxu0
    %v782 = vadd.f32 %v131, %v781
    %v783 = vpop.f32.mrf.mxu0
    %v784 = vadd.f32 %v135, %v783
    %785 = vmatprep.mubr.bf16.mxu0 0
    %786 = vmatmul.mubr.bf16.gmra.mxu0 %v208
    %v787 = vpop.f32.mrf.mxu0
    %v788 = vadd.f32 %v131, %v787
    %v789 = vpop.f32.mrf.mxu0
    %v790 = vadd.f32 %v135, %v789
    %v791 = vpop.f32.mrf.mxu0
    %v792 = vadd.f32 %v131, %v791
    %v793 = vpop.f32.mrf.mxu0
    %v794 = vadd.f32 %v135, %v793
    %795 = vmatprep.mubr.bf16.mxu0 0
    %796 = vmatmul.mubr.bf16.gmra.mxu0 %v211
    %v797 = vpop.f32.mrf.mxu0
    %v798 = vadd.f32 %v131, %v797
    %v799 = vpop.f32.mrf.mxu0
    %v800 = vadd.f32 %v135, %v799
    %v801 = vpop.f32.mrf.mxu0
    %v802 = vadd.f32 %v131, %v801
    %v803 = vpop.f32.mrf.mxu0
    %v804 = vadd.f32 %v135, %v803
    %805 = vmatprep.mubr.bf16.mxu0 0
    %806 = vmatmul.mubr.bf16.gmra.mxu0 %v214
    %v807 = vpop.f32.mrf.mxu0
    %v808 = vadd.f32 %v131, %v807
    %v809 = vpop.f32.mrf.mxu0
    %v810 = vadd.f32 %v135, %v809
    %v811 = vpop.f32.mrf.mxu0
    %v812 = vadd.f32 %v131, %v811
    %v813 = vpop.f32.mrf.mxu0
    %v814 = vadd.f32 %v135, %v813
    %815 = vmatprep.mubr.bf16.mxu0 0
    %816 = vmatmul.mubr.bf16.gmra.mxu0 %v217
    %v817 = vpop.f32.mrf.mxu0
    %v818 = vadd.f32 %v131, %v817
    %v819 = vpop.f32.mrf.mxu0
    %v820 = vadd.f32 %v135, %v819
    %v821 = vpop.f32.mrf.mxu0
    %v822 = vadd.f32 %v131, %v821
    %v823 = vpop.f32.mrf.mxu0
    %v824 = vadd.f32 %v135, %v823
    %825 = vmatprep.mubr.bf16.mxu0 0
    %826 = vmatmul.mubr.bf16.gmra.mxu0 %v220
    %v827 = vpop.f32.mrf.mxu0
    %v828 = vadd.f32 %v131, %v827
    %v829 = vpop.f32.mrf.mxu0
    %v830 = vadd.f32 %v135, %v829
    %v831 = vpop.f32.mrf.mxu0
    %v832 = vadd.f32 %v131, %v831
    %v833 = vpop.f32.mrf.mxu0
    %v834 = vadd.f32 %v135, %v833
    %835 = vmatprep.mubr.bf16.mxu0 0
    %836 = vmatmul.mubr.bf16.gmra.mxu0 %v223
    %v837 = vpop.f32.mrf.mxu0
    %v838 = vadd.f32 %v131, %v837
    %v839 = vpop.f32.mrf.mxu0
    %v840 = vadd.f32 %v135, %v839
    %v841 = vpop.f32.mrf.mxu0
    %v842 = vadd.f32 %v131, %v841
    %v843 = vpop.f32.mrf.mxu0
    %v844 = vadd.f32 %v135, %v843
    %845 = vmatprep.mubr.bf16.mxu0 0
    %846 = vmatmul.mubr.bf16.gmra.mxu0 %v226
    %v847 = vpop.f32.mrf.mxu0
    %v848 = vadd.f32 %v131, %v847
    %v849 = vpop.f32.mrf.mxu0
    %v850 = vadd.f32 %v135, %v849
    %v851 = vpop.f32.mrf.mxu0
    %v852 = vadd.f32 %v131, %v851
    %v853 = vpop.f32.mrf.mxu0
    %v854 = vadd.f32 %v135, %v853
    %855 = vmatprep.mubr.bf16.mxu0 0
    %856 = vmatmul.mubr.bf16.gmra.mxu0 %v229
    %v857 = vpop.f32.mrf.mxu0
    %v858 = vadd.f32 %v131, %v857
    %v859 = vpop.f32.mrf.mxu0
    %v860 = vadd.f32 %v135, %v859
    %v861 = vpop.f32.mrf.mxu0
    %v862 = vadd.f32 %v131, %v861
    %v863 = vpop.f32.mrf.mxu0
    %v864 = vadd.f32 %v135, %v863
    %865 = vmatprep.mubr.bf16.mxu0 0
    %866 = vmatmul.mubr.bf16.gmra.mxu0 %v232
    %v867 = vpop.f32.mrf.mxu0
    %v868 = vadd.f32 %v131, %v867
    %v869 = vpop.f32.mrf.mxu0
    %v870 = vadd.f32 %v135, %v869
    %v871 = vpop.f32.mrf.mxu0
    %v872 = vadd.f32 %v131, %v871
    %v873 = vpop.f32.mrf.mxu0
    %v874 = vadd.f32 %v135, %v873
    %875 = vmatprep.mubr.bf16.mxu0 0
    %876 = vmatmul.mubr.bf16.gmra.mxu0 %v235
    %v877 = vpop.f32.mrf.mxu0
    %v878 = vadd.f32 %v131, %v877
    %v879 = vpop.f32.mrf.mxu0
    %v880 = vadd.f32 %v135, %v879
    %v881 = vpop.f32.mrf.mxu0
    %v882 = vadd.f32 %v131, %v881
    %v883 = vpop.f32.mrf.mxu0
    %v884 = vadd.f32 %v135, %v883
    %885 = vmatprep.mubr.bf16.mxu0 0
    %886 = vmatmul.mubr.bf16.gmra.mxu0 %v238
    %v887 = vpop.f32.mrf.mxu0
    %v888 = vadd.f32 %v131, %v887
    %v889 = vpop.f32.mrf.mxu0
    %v890 = vadd.f32 %v135, %v889
    %v891 = vpop.f32.mrf.mxu0
    %v892 = vadd.f32 %v131, %v891
    %v893 = vpop.f32.mrf.mxu0
    %v894 = vadd.f32 %v135, %v893
    %895 = vmatprep.mubr.bf16.mxu0 0
    %896 = vmatmul.mubr.bf16.gmra.mxu0 %v241
    %v897 = vpop.f32.mrf.mxu0
    %v898 = vadd.f32 %v131, %v897
    %v899 = vpop.f32.mrf.mxu0
    %v900 = vadd.f32 %v135, %v899
    %v901 = vpop.f32.mrf.mxu0
    %v902 = vadd.f32 %v131, %v901
    %v903 = vpop.f32.mrf.mxu0
    %v904 = vadd.f32 %v135, %v903
    %905 = vmatprep.mubr.bf16.mxu0 0
    %906 = vmatmul.mubr.bf16.gmra.mxu0 %v244
    %v907 = vpop.f32.mrf.mxu0
    %v908 = vadd.f32 %v131, %v907
    %v909 = vpop.f32.mrf.mxu0
    %v910 = vadd.f32 %v135, %v909
    %v911 = vpop.f32.mrf.mxu0
    %v912 = vadd.f32 %v131, %v911
    %v913 = vpop.f32.mrf.mxu0
    %v914 = vadd.f32 %v135, %v913
    %915 = vmatprep.mubr.bf16.mxu0 0
    %916 = vmatmul.mubr.bf16.gmra.mxu0 %v247
    %v917 = vpop.f32.mrf.mxu0
    %v918 = vadd.f32 %v131, %v917
    %v919 = vpop.f32.mrf.mxu0
    %v920 = vadd.f32 %v135, %v919
    %v921 = vpop.f32.mrf.mxu0
    %v922 = vadd.f32 %v131, %v921
    %v923 = vpop.f32.mrf.mxu0
    %v924 = vadd.f32 %v135, %v923
    %925 = vmatprep.mubr.bf16.mxu0 0
    %926 = vmatmul.mubr.bf16.gmra.mxu0 %v250
    %v927 = vpop.f32.mrf.mxu0
    %v928 = vadd.f32 %v131, %v927
    %v929 = vpop.f32.mrf.mxu0
    %v930 = vadd.f32 %v135, %v929
    %v931 = vpop.f32.mrf.mxu0
    %v932 = vadd.f32 %v131, %v931
    %v933 = vpop.f32.mrf.mxu0
    %v934 = vadd.f32 %v135, %v933
    %935 = vmatprep.mubr.bf16.mxu0 0
    %936 = vmatmul.mubr.bf16.gmra.mxu0 %v253
    %v937 = vpop.f32.mrf.mxu0
    %v938 = vadd.f32 %v131, %v937
    %v939 = vpop.f32.mrf.mxu0
    %v940 = vadd.f32 %v135, %v939
    %v941 = vpop.f32.mrf.mxu0
    %v942 = vadd.f32 %v131, %v941
    %v943 = vpop.f32.mrf.mxu0
    %v944 = vadd.f32 %v135, %v943
    %945 = vmatprep.mubr.bf16.mxu0 0
    %946 = vmatmul.mubr.bf16.gmra.mxu0 %v256
    %v947 = vpop.f32.mrf.mxu0
    %v948 = vadd.f32 %v131, %v947
    %v949 = vpop.f32.mrf.mxu0
    %v950 = vadd.f32 %v135, %v949
    %v951 = vpop.f32.mrf.mxu0
    %v952 = vadd.f32 %v131, %v951
    %v953 = vpop.f32.mrf.mxu0
    %v954 = vadd.f32 %v135, %v953
    %955 = vmatprep.mubr.bf16.mxu0 0
    %956 = vmatmul.mubr.bf16.gmra.mxu0 %v259
    %v957 = vpop.f32.mrf.mxu0
    %v958 = vadd.f32 %v131, %v957
    %v959 = vpop.f32.mrf.mxu0
    %v960 = vadd.f32 %v135, %v959
    %v961 = vpop.f32.mrf.mxu0
    %v962 = vadd.f32 %v131, %v961
    %v963 = vpop.f32.mrf.mxu0
    %v964 = vadd.f32 %v135, %v963
    %965 = vmatprep.mubr.bf16.mxu0 0
    %966 = vmatmul.mubr.bf16.gmra.mxu0 %v262
    %v967 = vpop.f32.mrf.mxu0
    %v968 = vadd.f32 %v131, %v967
    %v969 = vpop.f32.mrf.mxu0
    %v970 = vadd.f32 %v135, %v969
    %v971 = vpop.f32.mrf.mxu0
    %v972 = vadd.f32 %v131, %v971
    %v973 = vpop.f32.mrf.mxu0
    %v974 = vadd.f32 %v135, %v973
    %975 = vmatprep.mubr.bf16.mxu0 0
    %976 = vmatmul.mubr.bf16.gmra.mxu0 %v265
    %v977 = vpop.f32.mrf.mxu0
    %v978 = vadd.f32 %v131, %v977
    %v979 = vpop.f32.mrf.mxu0
    %v980 = vadd.f32 %v135, %v979
    %v981 = vpop.f32.mrf.mxu0
    %v982 = vadd.f32 %v131, %v981
    %v983 = vpop.f32.mrf.mxu0
    %v984 = vadd.f32 %v135, %v983
    %985 = vdwg.mxu0
    %v986 = vpack.c.bf16 %v319, %v315
    %v987 = vpack.c.bf16 %v321, %v317
    %v988 = vpack.c.bf16 %v672, %v668
    %v989 = vpack.c.bf16 %v674, %v670
    %v990 = vpack.c.bf16 %v329, %v325
    %v991 = vpack.c.bf16 %v331, %v327
    %v992 = vpack.c.bf16 %v682, %v678
    %v993 = vpack.c.bf16 %v684, %v680
    %v994 = vpack.c.bf16 %v339, %v335
    %v995 = vpack.c.bf16 %v341, %v337
    %v996 = vpack.c.bf16 %v692, %v688
    %v997 = vpack.c.bf16 %v694, %v690
    %v998 = vpack.c.bf16 %v349, %v345
    %v999 = vpack.c.bf16 %v351, %v347
    %v1000 = vpack.c.bf16 %v702, %v698
    %v1001 = vpack.c.bf16 %v704, %v700
    %v1002 = vpack.c.bf16 %v359, %v355
    %v1003 = vpack.c.bf16 %v361, %v357
    %v1004 = vpack.c.bf16 %v712, %v708
    %v1005 = vpack.c.bf16 %v714, %v710
    %v1006 = vpack.c.bf16 %v369, %v365
    %v1007 = vpack.c.bf16 %v371, %v367
    %v1008 = vpack.c.bf16 %v722, %v718
    %v1009 = vpack.c.bf16 %v724, %v720
    %v1010 = vpack.c.bf16 %v379, %v375
    %v1011 = vpack.c.bf16 %v381, %v377
    %v1012 = vpack.c.bf16 %v732, %v728
    %v1013 = vpack.c.bf16 %v734, %v730
    %v1014 = vpack.c.bf16 %v389, %v385
    %v1015 = vpack.c.bf16 %v391, %v387
    %v1016 = vpack.c.bf16 %v742, %v738
    %v1017 = vpack.c.bf16 %v744, %v740
    %v1018 = vpack.c.bf16 %v399, %v395
    %v1019 = vpack.c.bf16 %v401, %v397
    %v1020 = vpack.c.bf16 %v752, %v748
    %v1021 = vpack.c.bf16 %v754, %v750
    %v1022 = vpack.c.bf16 %v409, %v405
    %v1023 = vpack.c.bf16 %v411, %v407
    %v1024 = vpack.c.bf16 %v762, %v758
    %v1025 = vpack.c.bf16 %v764, %v760
    %v1026 = vpack.c.bf16 %v419, %v415
    %v1027 = vpack.c.bf16 %v421, %v417
    %v1028 = vpack.c.bf16 %v772, %v768
    %v1029 = vpack.c.bf16 %v774, %v770
    %v1030 = vpack.c.bf16 %v429, %v425
    %v1031 = vpack.c.bf16 %v431, %v427
    %v1032 = vpack.c.bf16 %v782, %v778
    %v1033 = vpack.c.bf16 %v784, %v780
    %v1034 = vpack.c.bf16 %v439, %v435
    %v1035 = vpack.c.bf16 %v441, %v437
    %v1036 = vpack.c.bf16 %v792, %v788
    %v1037 = vpack.c.bf16 %v794, %v790
    %v1038 = vpack.c.bf16 %v449, %v445
    %v1039 = vpack.c.bf16 %v451, %v447
    %v1040 = vpack.c.bf16 %v802, %v798
    %v1041 = vpack.c.bf16 %v804, %v800
    %v1042 = vpack.c.bf16 %v459, %v455
    %v1043 = vpack.c.bf16 %v461, %v457
    %v1044 = vpack.c.bf16 %v812, %v808
    %v1045 = vpack.c.bf16 %v814, %v810
    %v1046 = vpack.c.bf16 %v469, %v465
    %v1047 = vpack.c.bf16 %v471, %v467
    %v1048 = vpack.c.bf16 %v822, %v818
    %v1049 = vpack.c.bf16 %v824, %v820
    %v1050 = vpack.c.bf16 %v479, %v475
    %v1051 = vpack.c.bf16 %v481, %v477
    %v1052 = vpack.c.bf16 %v832, %v828
    %v1053 = vpack.c.bf16 %v834, %v830
    %v1054 = vpack.c.bf16 %v489, %v485
    %v1055 = vpack.c.bf16 %v491, %v487
    %v1056 = vpack.c.bf16 %v842, %v838
    %v1057 = vpack.c.bf16 %v844, %v840
    %v1058 = vpack.c.bf16 %v499, %v495
    %v1059 = vpack.c.bf16 %v501, %v497
    %v1060 = vpack.c.bf16 %v852, %v848
    %v1061 = vpack.c.bf16 %v854, %v850
    %v1062 = vpack.c.bf16 %v509, %v505
    %v1063 = vpack.c.bf16 %v511, %v507
    %v1064 = vpack.c.bf16 %v862, %v858
    %v1065 = vpack.c.bf16 %v864, %v860
    %v1066 = vpack.c.bf16 %v519, %v515
    %v1067 = vpack.c.bf16 %v521, %v517
    %v1068 = vpack.c.bf16 %v872, %v868
    %v1069 = vpack.c.bf16 %v874, %v870
    %v1070 = vpack.c.bf16 %v529, %v525
    %v1071 = vpack.c.bf16 %v531, %v527
    %v1072 = vpack.c.bf16 %v882, %v878
    %v1073 = vpack.c.bf16 %v884, %v880
    %v1074 = vpack.c.bf16 %v539, %v535
    %v1075 = vpack.c.bf16 %v541, %v537
    %v1076 = vpack.c.bf16 %v892, %v888
    %v1077 = vpack.c.bf16 %v894, %v890
    %v1078 = vpack.c.bf16 %v549, %v545
    %v1079 = vpack.c.bf16 %v551, %v547
    %v1080 = vpack.c.bf16 %v902, %v898
    %v1081 = vpack.c.bf16 %v904, %v900
    %v1082 = vpack.c.bf16 %v559, %v555
    %v1083 = vpack.c.bf16 %v561, %v557
    %v1084 = vpack.c.bf16 %v912, %v908
    %v1085 = vpack.c.bf16 %v914, %v910
    %v1086 = vpack.c.bf16 %v569, %v565
    %v1087 = vpack.c.bf16 %v571, %v567
    %v1088 = vpack.c.bf16 %v922, %v918
    %v1089 = vpack.c.bf16 %v924, %v920
    %v1090 = vpack.c.bf16 %v579, %v575
    %v1091 = vpack.c.bf16 %v581, %v577
    %v1092 = vpack.c.bf16 %v932, %v928
    %v1093 = vpack.c.bf16 %v934, %v930
    %v1094 = vpack.c.bf16 %v589, %v585
    %v1095 = vpack.c.bf16 %v591, %v587
    %v1096 = vpack.c.bf16 %v942, %v938
    %v1097 = vpack.c.bf16 %v944, %v940
    %v1098 = vpack.c.bf16 %v599, %v595
    %v1099 = vpack.c.bf16 %v601, %v597
    %v1100 = vpack.c.bf16 %v952, %v948
    %v1101 = vpack.c.bf16 %v954, %v950
    %v1102 = vpack.c.bf16 %v609, %v605
    %v1103 = vpack.c.bf16 %v611, %v607
    %v1104 = vpack.c.bf16 %v962, %v958
    %v1105 = vpack.c.bf16 %v964, %v960
    %v1106 = vpack.c.bf16 %v619, %v615
    %v1107 = vpack.c.bf16 %v621, %v617
    %v1108 = vpack.c.bf16 %v972, %v968
    %v1109 = vpack.c.bf16 %v974, %v970
    %v1110 = vpack.c.bf16 %v629, %v625
    %v1111 = vpack.c.bf16 %v631, %v627
    %v1112 = vpack.c.bf16 %v982, %v978
    %v1113 = vpack.c.bf16 %v984, %v980
    %v1242 = vunpack.c.l.b16 %v986
    %v1243 = vunpack.c.l.b16 %v987
    %v1244 = vunpack.c.l.b16 %v988
    %v1245 = vunpack.c.l.b16 %v989
    %v1246 = vunpack.c.h.b16 %v986
    %v1247 = vunpack.c.h.b16 %v987
    %v1248 = vunpack.c.h.b16 %v988
    %v1249 = vunpack.c.h.b16 %v989
    %v1250 = vunpack.c.l.b16 %v990
    %v1251 = vunpack.c.l.b16 %v991
    %v1252 = vunpack.c.l.b16 %v992
    %v1253 = vunpack.c.l.b16 %v993
    %v1254 = vunpack.c.h.b16 %v990
    %v1255 = vunpack.c.h.b16 %v991
    %v1256 = vunpack.c.h.b16 %v992
    %v1257 = vunpack.c.h.b16 %v993
    %v1258 = vunpack.c.l.b16 %v994
    %v1259 = vunpack.c.l.b16 %v995
    %v1260 = vunpack.c.l.b16 %v996
    %v1261 = vunpack.c.l.b16 %v997
    %v1262 = vunpack.c.h.b16 %v994
    %v1263 = vunpack.c.h.b16 %v995
    %v1264 = vunpack.c.h.b16 %v996
    %v1265 = vunpack.c.h.b16 %v997
    %v1266 = vunpack.c.l.b16 %v998
    %v1267 = vunpack.c.l.b16 %v999
    %v1268 = vunpack.c.l.b16 %v1000
    %v1269 = vunpack.c.l.b16 %v1001
    %v1270 = vunpack.c.h.b16 %v998
    %v1271 = vunpack.c.h.b16 %v999
    %v1272 = vunpack.c.h.b16 %v1000
    %v1273 = vunpack.c.h.b16 %v1001
    %v1274 = vunpack.c.l.b16 %v1002
    %v1275 = vunpack.c.l.b16 %v1003
    %v1276 = vunpack.c.l.b16 %v1004
    %v1277 = vunpack.c.l.b16 %v1005
    %v1278 = vunpack.c.h.b16 %v1002
    %v1279 = vunpack.c.h.b16 %v1003
    %v1280 = vunpack.c.h.b16 %v1004
    %v1281 = vunpack.c.h.b16 %v1005
    %v1282 = vunpack.c.l.b16 %v1006
    %v1283 = vunpack.c.l.b16 %v1007
    %v1284 = vunpack.c.l.b16 %v1008
    %v1285 = vunpack.c.l.b16 %v1009
    %v1286 = vunpack.c.h.b16 %v1006
    %v1287 = vunpack.c.h.b16 %v1007
    %v1288 = vunpack.c.h.b16 %v1008
    %v1289 = vunpack.c.h.b16 %v1009
    %v1290 = vunpack.c.l.b16 %v1010
    %v1291 = vunpack.c.l.b16 %v1011
    %v1292 = vunpack.c.l.b16 %v1012
    %v1293 = vunpack.c.l.b16 %v1013
    %v1294 = vunpack.c.h.b16 %v1010
    %v1295 = vunpack.c.h.b16 %v1011
    %v1296 = vunpack.c.h.b16 %v1012
    %v1297 = vunpack.c.h.b16 %v1013
    %v1298 = vunpack.c.l.b16 %v1014
    %v1299 = vunpack.c.l.b16 %v1015
    %v1300 = vunpack.c.l.b16 %v1016
    %v1301 = vunpack.c.l.b16 %v1017
    %v1302 = vunpack.c.h.b16 %v1014
    %v1303 = vunpack.c.h.b16 %v1015
    %v1304 = vunpack.c.h.b16 %v1016
    %v1305 = vunpack.c.h.b16 %v1017
    %v1306 = vunpack.c.l.b16 %v1018
    %v1307 = vunpack.c.l.b16 %v1019
    %v1308 = vunpack.c.l.b16 %v1020
    %v1309 = vunpack.c.l.b16 %v1021
    %v1310 = vunpack.c.h.b16 %v1018
    %v1311 = vunpack.c.h.b16 %v1019
    %v1312 = vunpack.c.h.b16 %v1020
    %v1313 = vunpack.c.h.b16 %v1021
    %v1314 = vunpack.c.l.b16 %v1022
    %v1315 = vunpack.c.l.b16 %v1023
    %v1316 = vunpack.c.l.b16 %v1024
    %v1317 = vunpack.c.l.b16 %v1025
    %v1318 = vunpack.c.h.b16 %v1022
    %v1319 = vunpack.c.h.b16 %v1023
    %v1320 = vunpack.c.h.b16 %v1024
    %v1321 = vunpack.c.h.b16 %v1025
    %v1322 = vunpack.c.l.b16 %v1026
    %v1323 = vunpack.c.l.b16 %v1027
    %v1324 = vunpack.c.l.b16 %v1028
    %v1325 = vunpack.c.l.b16 %v1029
    %v1326 = vunpack.c.h.b16 %v1026
    %v1327 = vunpack.c.h.b16 %v1027
    %v1328 = vunpack.c.h.b16 %v1028
    %v1329 = vunpack.c.h.b16 %v1029
    %v1330 = vunpack.c.l.b16 %v1030
    %v1331 = vunpack.c.l.b16 %v1031
    %v1332 = vunpack.c.l.b16 %v1032
    %v1333 = vunpack.c.l.b16 %v1033
    %v1334 = vunpack.c.h.b16 %v1030
    %v1335 = vunpack.c.h.b16 %v1031
    %v1336 = vunpack.c.h.b16 %v1032
    %v1337 = vunpack.c.h.b16 %v1033
    %v1338 = vunpack.c.l.b16 %v1034
    %v1339 = vunpack.c.l.b16 %v1035
    %v1340 = vunpack.c.l.b16 %v1036
    %v1341 = vunpack.c.l.b16 %v1037
    %v1342 = vunpack.c.h.b16 %v1034
    %v1343 = vunpack.c.h.b16 %v1035
    %v1344 = vunpack.c.h.b16 %v1036
    %v1345 = vunpack.c.h.b16 %v1037
    %v1346 = vunpack.c.l.b16 %v1038
    %v1347 = vunpack.c.l.b16 %v1039
    %v1348 = vunpack.c.l.b16 %v1040
    %v1349 = vunpack.c.l.b16 %v1041
    %v1350 = vunpack.c.h.b16 %v1038
    %v1351 = vunpack.c.h.b16 %v1039
    %v1352 = vunpack.c.h.b16 %v1040
    %v1353 = vunpack.c.h.b16 %v1041
    %v1354 = vunpack.c.l.b16 %v1042
    %v1355 = vunpack.c.l.b16 %v1043
    %v1356 = vunpack.c.l.b16 %v1044
    %v1357 = vunpack.c.l.b16 %v1045
    %v1358 = vunpack.c.h.b16 %v1042
    %v1359 = vunpack.c.h.b16 %v1043
    %v1360 = vunpack.c.h.b16 %v1044
    %v1361 = vunpack.c.h.b16 %v1045
    %v1362 = vunpack.c.l.b16 %v1046
    %v1363 = vunpack.c.l.b16 %v1047
    %v1364 = vunpack.c.l.b16 %v1048
    %v1365 = vunpack.c.l.b16 %v1049
    %v1366 = vunpack.c.h.b16 %v1046
    %v1367 = vunpack.c.h.b16 %v1047
    %v1368 = vunpack.c.h.b16 %v1048
    %v1369 = vunpack.c.h.b16 %v1049
    %v1370 = vunpack.c.l.b16 %v1050
    %v1371 = vunpack.c.l.b16 %v1051
    %v1372 = vunpack.c.l.b16 %v1052
    %v1373 = vunpack.c.l.b16 %v1053
    %v1374 = vunpack.c.h.b16 %v1050
    %v1375 = vunpack.c.h.b16 %v1051
    %v1376 = vunpack.c.h.b16 %v1052
    %v1377 = vunpack.c.h.b16 %v1053
    %v1378 = vunpack.c.l.b16 %v1054
    %v1379 = vunpack.c.l.b16 %v1055
    %v1380 = vunpack.c.l.b16 %v1056
    %v1381 = vunpack.c.l.b16 %v1057
    %v1382 = vunpack.c.h.b16 %v1054
    %v1383 = vunpack.c.h.b16 %v1055
    %v1384 = vunpack.c.h.b16 %v1056
    %v1385 = vunpack.c.h.b16 %v1057
    %v1386 = vunpack.c.l.b16 %v1058
    %v1387 = vunpack.c.l.b16 %v1059
    %v1388 = vunpack.c.l.b16 %v1060
    %v1389 = vunpack.c.l.b16 %v1061
    %v1390 = vunpack.c.h.b16 %v1058
    %v1391 = vunpack.c.h.b16 %v1059
    %v1392 = vunpack.c.h.b16 %v1060
    %v1393 = vunpack.c.h.b16 %v1061
    %v1394 = vunpack.c.l.b16 %v1062
    %v1395 = vunpack.c.l.b16 %v1063
    %v1396 = vunpack.c.l.b16 %v1064
    %v1397 = vunpack.c.l.b16 %v1065
    %v1398 = vunpack.c.h.b16 %v1062
    %v1399 = vunpack.c.h.b16 %v1063
    %v1400 = vunpack.c.h.b16 %v1064
    %v1401 = vunpack.c.h.b16 %v1065
    %v1402 = vunpack.c.l.b16 %v1066
    %v1403 = vunpack.c.l.b16 %v1067
    %v1404 = vunpack.c.l.b16 %v1068
    %v1405 = vunpack.c.l.b16 %v1069
    %v1406 = vunpack.c.h.b16 %v1066
    %v1407 = vunpack.c.h.b16 %v1067
    %v1408 = vunpack.c.h.b16 %v1068
    %v1409 = vunpack.c.h.b16 %v1069
    %v1410 = vunpack.c.l.b16 %v1070
    %v1411 = vunpack.c.l.b16 %v1071
    %v1412 = vunpack.c.l.b16 %v1072
    %v1413 = vunpack.c.l.b16 %v1073
    %v1414 = vunpack.c.h.b16 %v1070
    %v1415 = vunpack.c.h.b16 %v1071
    %v1416 = vunpack.c.h.b16 %v1072
    %v1417 = vunpack.c.h.b16 %v1073
    %v1418 = vunpack.c.l.b16 %v1074
    %v1419 = vunpack.c.l.b16 %v1075
    %v1420 = vunpack.c.l.b16 %v1076
    %v1421 = vunpack.c.l.b16 %v1077
    %v1422 = vunpack.c.h.b16 %v1074
    %v1423 = vunpack.c.h.b16 %v1075
    %v1424 = vunpack.c.h.b16 %v1076
    %v1425 = vunpack.c.h.b16 %v1077
    %v1426 = vunpack.c.l.b16 %v1078
    %v1427 = vunpack.c.l.b16 %v1079
    %v1428 = vunpack.c.l.b16 %v1080
    %v1429 = vunpack.c.l.b16 %v1081
    %v1430 = vunpack.c.h.b16 %v1078
    %v1431 = vunpack.c.h.b16 %v1079
    %v1432 = vunpack.c.h.b16 %v1080
    %v1433 = vunpack.c.h.b16 %v1081
    %v1434 = vunpack.c.l.b16 %v1082
    %v1435 = vunpack.c.l.b16 %v1083
    %v1436 = vunpack.c.l.b16 %v1084
    %v1437 = vunpack.c.l.b16 %v1085
    %v1438 = vunpack.c.h.b16 %v1082
    %v1439 = vunpack.c.h.b16 %v1083
    %v1440 = vunpack.c.h.b16 %v1084
    %v1441 = vunpack.c.h.b16 %v1085
    %v1442 = vunpack.c.l.b16 %v1086
    %v1443 = vunpack.c.l.b16 %v1087
    %v1444 = vunpack.c.l.b16 %v1088
    %v1445 = vunpack.c.l.b16 %v1089
    %v1446 = vunpack.c.h.b16 %v1086
    %v1447 = vunpack.c.h.b16 %v1087
    %v1448 = vunpack.c.h.b16 %v1088
    %v1449 = vunpack.c.h.b16 %v1089
    %v1450 = vunpack.c.l.b16 %v1090
    %v1451 = vunpack.c.l.b16 %v1091
    %v1452 = vunpack.c.l.b16 %v1092
    %v1453 = vunpack.c.l.b16 %v1093
    %v1454 = vunpack.c.h.b16 %v1090
    %v1455 = vunpack.c.h.b16 %v1091
    %v1456 = vunpack.c.h.b16 %v1092
    %v1457 = vunpack.c.h.b16 %v1093
    %v1458 = vunpack.c.l.b16 %v1094
    %v1459 = vunpack.c.l.b16 %v1095
    %v1460 = vunpack.c.l.b16 %v1096
    %v1461 = vunpack.c.l.b16 %v1097
    %v1462 = vunpack.c.h.b16 %v1094
    %v1463 = vunpack.c.h.b16 %v1095
    %v1464 = vunpack.c.h.b16 %v1096
    %v1465 = vunpack.c.h.b16 %v1097
    %v1466 = vunpack.c.l.b16 %v1098
    %v1467 = vunpack.c.l.b16 %v1099
    %v1468 = vunpack.c.l.b16 %v1100
    %v1469 = vunpack.c.l.b16 %v1101
    %v1470 = vunpack.c.h.b16 %v1098
    %v1471 = vunpack.c.h.b16 %v1099
    %v1472 = vunpack.c.h.b16 %v1100
    %v1473 = vunpack.c.h.b16 %v1101
    %v1474 = vunpack.c.l.b16 %v1102
    %v1475 = vunpack.c.l.b16 %v1103
    %v1476 = vunpack.c.l.b16 %v1104
    %v1477 = vunpack.c.l.b16 %v1105
    %v1478 = vunpack.c.h.b16 %v1102
    %v1479 = vunpack.c.h.b16 %v1103
    %v1480 = vunpack.c.h.b16 %v1104
    %v1481 = vunpack.c.h.b16 %v1105
    %v1482 = vunpack.c.l.b16 %v1106
    %v1483 = vunpack.c.l.b16 %v1107
    %v1484 = vunpack.c.l.b16 %v1108
    %v1485 = vunpack.c.l.b16 %v1109
    %v1486 = vunpack.c.h.b16 %v1106
    %v1487 = vunpack.c.h.b16 %v1107
    %v1488 = vunpack.c.h.b16 %v1108
    %v1489 = vunpack.c.h.b16 %v1109
    %v1490 = vunpack.c.l.b16 %v1110
    %v1491 = vunpack.c.l.b16 %v1111
    %v1492 = vunpack.c.l.b16 %v1112
    %v1493 = vunpack.c.l.b16 %v1113
    %v1494 = vunpack.c.h.b16 %v1110
    %v1495 = vunpack.c.h.b16 %v1111
    %v1496 = vunpack.c.h.b16 %v1112
    %v1497 = vunpack.c.h.b16 %v1113
    %v1498 = vpack.c.b16 %v1243, %v1242
    %v1499 = vpack.c.b16 %v1245, %v1244
    %v1500 = vpack.c.b16 %v1247, %v1246
    %v1501 = vpack.c.b16 %v1249, %v1248
    %v1502 = vpack.c.b16 %v1251, %v1250
    %v1503 = vpack.c.b16 %v1253, %v1252
    %v1504 = vpack.c.b16 %v1255, %v1254
    %v1505 = vpack.c.b16 %v1257, %v1256
    %v1506 = vpack.c.b16 %v1259, %v1258
    %v1507 = vpack.c.b16 %v1261, %v1260
    %v1508 = vpack.c.b16 %v1263, %v1262
    %v1509 = vpack.c.b16 %v1265, %v1264
    %v1510 = vpack.c.b16 %v1267, %v1266
    %v1511 = vpack.c.b16 %v1269, %v1268
    %v1512 = vpack.c.b16 %v1271, %v1270
    %v1513 = vpack.c.b16 %v1273, %v1272
    %v1514 = vpack.c.b16 %v1275, %v1274
    %v1515 = vpack.c.b16 %v1277, %v1276
    %v1516 = vpack.c.b16 %v1279, %v1278
    %v1517 = vpack.c.b16 %v1281, %v1280
    %v1518 = vpack.c.b16 %v1283, %v1282
    %v1519 = vpack.c.b16 %v1285, %v1284
    %v1520 = vpack.c.b16 %v1287, %v1286
    %v1521 = vpack.c.b16 %v1289, %v1288
    %v1522 = vpack.c.b16 %v1291, %v1290
    %v1523 = vpack.c.b16 %v1293, %v1292
    %v1524 = vpack.c.b16 %v1295, %v1294
    %v1525 = vpack.c.b16 %v1297, %v1296
    %v1526 = vpack.c.b16 %v1299, %v1298
    %v1527 = vpack.c.b16 %v1301, %v1300
    %v1528 = vpack.c.b16 %v1303, %v1302
    %v1529 = vpack.c.b16 %v1305, %v1304
    %v1530 = vpack.c.b16 %v1307, %v1306
    %v1531 = vpack.c.b16 %v1309, %v1308
    %v1532 = vpack.c.b16 %v1311, %v1310
    %v1533 = vpack.c.b16 %v1313, %v1312
    %v1534 = vpack.c.b16 %v1315, %v1314
    %v1535 = vpack.c.b16 %v1317, %v1316
    %v1536 = vpack.c.b16 %v1319, %v1318
    %v1537 = vpack.c.b16 %v1321, %v1320
    %v1538 = vpack.c.b16 %v1323, %v1322
    %v1539 = vpack.c.b16 %v1325, %v1324
    %v1540 = vpack.c.b16 %v1327, %v1326
    %v1541 = vpack.c.b16 %v1329, %v1328
    %v1542 = vpack.c.b16 %v1331, %v1330
    %v1543 = vpack.c.b16 %v1333, %v1332
    %v1544 = vpack.c.b16 %v1335, %v1334
    %v1545 = vpack.c.b16 %v1337, %v1336
    %v1546 = vpack.c.b16 %v1339, %v1338
    %v1547 = vpack.c.b16 %v1341, %v1340
    %v1548 = vpack.c.b16 %v1343, %v1342
    %v1549 = vpack.c.b16 %v1345, %v1344
    %v1550 = vpack.c.b16 %v1347, %v1346
    %v1551 = vpack.c.b16 %v1349, %v1348
    %v1552 = vpack.c.b16 %v1351, %v1350
    %v1553 = vpack.c.b16 %v1353, %v1352
    %v1554 = vpack.c.b16 %v1355, %v1354
    %v1555 = vpack.c.b16 %v1357, %v1356
    %v1556 = vpack.c.b16 %v1359, %v1358
    %v1557 = vpack.c.b16 %v1361, %v1360
    %v1558 = vpack.c.b16 %v1363, %v1362
    %v1559 = vpack.c.b16 %v1365, %v1364
    %v1560 = vpack.c.b16 %v1367, %v1366
    %v1561 = vpack.c.b16 %v1369, %v1368
    %v1562 = vpack.c.b16 %v1371, %v1370
    %v1563 = vpack.c.b16 %v1373, %v1372
    %v1564 = vpack.c.b16 %v1375, %v1374
    %v1565 = vpack.c.b16 %v1377, %v1376
    %v1566 = vpack.c.b16 %v1379, %v1378
    %v1567 = vpack.c.b16 %v1381, %v1380
    %v1568 = vpack.c.b16 %v1383, %v1382
    %v1569 = vpack.c.b16 %v1385, %v1384
    %v1570 = vpack.c.b16 %v1387, %v1386
    %v1571 = vpack.c.b16 %v1389, %v1388
    %v1572 = vpack.c.b16 %v1391, %v1390
    %v1573 = vpack.c.b16 %v1393, %v1392
    %v1574 = vpack.c.b16 %v1395, %v1394
    %v1575 = vpack.c.b16 %v1397, %v1396
    %v1576 = vpack.c.b16 %v1399, %v1398
    %v1577 = vpack.c.b16 %v1401, %v1400
    %v1578 = vpack.c.b16 %v1403, %v1402
    %v1579 = vpack.c.b16 %v1405, %v1404
    %v1580 = vpack.c.b16 %v1407, %v1406
    %v1581 = vpack.c.b16 %v1409, %v1408
    %v1582 = vpack.c.b16 %v1411, %v1410
    %v1583 = vpack.c.b16 %v1413, %v1412
    %v1584 = vpack.c.b16 %v1415, %v1414
    %v1585 = vpack.c.b16 %v1417, %v1416
    %v1586 = vpack.c.b16 %v1419, %v1418
    %v1587 = vpack.c.b16 %v1421, %v1420
    %v1588 = vpack.c.b16 %v1423, %v1422
    %v1589 = vpack.c.b16 %v1425, %v1424
    %v1590 = vpack.c.b16 %v1427, %v1426
    %v1591 = vpack.c.b16 %v1429, %v1428
    %v1592 = vpack.c.b16 %v1431, %v1430
    %v1593 = vpack.c.b16 %v1433, %v1432
    %v1594 = vpack.c.b16 %v1435, %v1434
    %v1595 = vpack.c.b16 %v1437, %v1436
    %v1596 = vpack.c.b16 %v1439, %v1438
    %v1597 = vpack.c.b16 %v1441, %v1440
    %v1598 = vpack.c.b16 %v1443, %v1442
    %v1599 = vpack.c.b16 %v1445, %v1444
    %v1600 = vpack.c.b16 %v1447, %v1446
    %v1601 = vpack.c.b16 %v1449, %v1448
    %v1602 = vpack.c.b16 %v1451, %v1450
    %v1603 = vpack.c.b16 %v1453, %v1452
    %v1604 = vpack.c.b16 %v1455, %v1454
    %v1605 = vpack.c.b16 %v1457, %v1456
    %v1606 = vpack.c.b16 %v1459, %v1458
    %v1607 = vpack.c.b16 %v1461, %v1460
    %v1608 = vpack.c.b16 %v1463, %v1462
    %v1609 = vpack.c.b16 %v1465, %v1464
    %v1610 = vpack.c.b16 %v1467, %v1466
    %v1611 = vpack.c.b16 %v1469, %v1468
    %v1612 = vpack.c.b16 %v1471, %v1470
    %v1613 = vpack.c.b16 %v1473, %v1472
    %v1614 = vpack.c.b16 %v1475, %v1474
    %v1615 = vpack.c.b16 %v1477, %v1476
    %v1616 = vpack.c.b16 %v1479, %v1478
    %v1617 = vpack.c.b16 %v1481, %v1480
    %v1618 = vpack.c.b16 %v1483, %v1482
    %v1619 = vpack.c.b16 %v1485, %v1484
    %v1620 = vpack.c.b16 %v1487, %v1486
    %v1621 = vpack.c.b16 %v1489, %v1488
    %v1622 = vpack.c.b16 %v1491, %v1490
    %v1623 = vpack.c.b16 %v1493, %v1492
    %v1624 = vpack.c.b16 %v1495, %v1494
    %v1625 = vpack.c.b16 %v1497, %v1496
    %1754 = vst [vmem:[#allocation2] sm:$0xff] %v1498
    %1755 = vst [vmem:[#allocation2 + $0x8] sm:$0xff] %v1499
    %1756 = vst [vmem:[#allocation2 + $0x10] sm:$0xff] %v1500
    %1757 = vst [vmem:[#allocation2 + $0x18] sm:$0xff] %v1501
    %1758 = vst [vmem:[#allocation2 + $0x20] sm:$0xff] %v1502
    %1759 = vst [vmem:[#allocation2 + $0x28] sm:$0xff] %v1503
    %1760 = vst [vmem:[#allocation2 + $0x30] sm:$0xff] %v1504
    %1761 = vst [vmem:[#allocation2 + $0x38] sm:$0xff] %v1505
    %1762 = vst [vmem:[#allocation2 + $0x40] sm:$0xff] %v1506
    %1763 = vst [vmem:[#allocation2 + $0x48] sm:$0xff] %v1507
    %1764 = vst [vmem:[#allocation2 + $0x50] sm:$0xff] %v1508
    %1765 = vst [vmem:[#allocation2 + $0x58] sm:$0xff] %v1509
    %1766 = vst [vmem:[#allocation2 + $0x60] sm:$0xff] %v1510
    %1767 = vst [vmem:[#allocation2 + $0x68] sm:$0xff] %v1511
    %1768 = vst [vmem:[#allocation2 + $0x70] sm:$0xff] %v1512
    %1769 = vst [vmem:[#allocation2 + $0x78] sm:$0xff] %v1513
    %1770 = vst [vmem:[#allocation2 + $0x80] sm:$0xff] %v1514
    %1771 = vst [vmem:[#allocation2 + $0x88] sm:$0xff] %v1515
    %1772 = vst [vmem:[#allocation2 + $0x90] sm:$0xff] %v1516
    %1773 = vst [vmem:[#allocation2 + $0x98] sm:$0xff] %v1517
    %1774 = vst [vmem:[#allocation2 + $0xa0] sm:$0xff] %v1518
    %1775 = vst [vmem:[#allocation2 + $0xa8] sm:$0xff] %v1519
    %1776 = vst [vmem:[#allocation2 + $0xb0] sm:$0xff] %v1520
    %1777 = vst [vmem:[#allocation2 + $0xb8] sm:$0xff] %v1521
    %1778 = vst [vmem:[#allocation2 + $0xc0] sm:$0xff] %v1522
    %1779 = vst [vmem:[#allocation2 + $0xc8] sm:$0xff] %v1523
    %1780 = vst [vmem:[#allocation2 + $0xd0] sm:$0xff] %v1524
    %1781 = vst [vmem:[#allocation2 + $0xd8] sm:$0xff] %v1525
    %1782 = vst [vmem:[#allocation2 + $0xe0] sm:$0xff] %v1526
    %1783 = vst [vmem:[#allocation2 + $0xe8] sm:$0xff] %v1527
    %1784 = vst [vmem:[#allocation2 + $0xf0] sm:$0xff] %v1528
    %1785 = vst [vmem:[#allocation2 + $0xf8] sm:$0xff] %v1529
    %1786 = vst [vmem:[#allocation2 + $0x100] sm:$0xff] %v1530
    %1787 = vst [vmem:[#allocation2 + $0x108] sm:$0xff] %v1531
    %1788 = vst [vmem:[#allocation2 + $0x110] sm:$0xff] %v1532
    %1789 = vst [vmem:[#allocation2 + $0x118] sm:$0xff] %v1533
    %1790 = vst [vmem:[#allocation2 + $0x120] sm:$0xff] %v1534
    %1791 = vst [vmem:[#allocation2 + $0x128] sm:$0xff] %v1535
    %1792 = vst [vmem:[#allocation2 + $0x130] sm:$0xff] %v1536
    %1793 = vst [vmem:[#allocation2 + $0x138] sm:$0xff] %v1537
    %1794 = vst [vmem:[#allocation2 + $0x140] sm:$0xff] %v1538
    %1795 = vst [vmem:[#allocation2 + $0x148] sm:$0xff] %v1539
    %1796 = vst [vmem:[#allocation2 + $0x150] sm:$0xff] %v1540
    %1797 = vst [vmem:[#allocation2 + $0x158] sm:$0xff] %v1541
    %1798 = vst [vmem:[#allocation2 + $0x160] sm:$0xff] %v1542
    %1799 = vst [vmem:[#allocation2 + $0x168] sm:$0xff] %v1543
    %1800 = vst [vmem:[#allocation2 + $0x170] sm:$0xff] %v1544
    %1801 = vst [vmem:[#allocation2 + $0x178] sm:$0xff] %v1545
    %1802 = vst [vmem:[#allocation2 + $0x180] sm:$0xff] %v1546
    %1803 = vst [vmem:[#allocation2 + $0x188] sm:$0xff] %v1547
    %1804 = vst [vmem:[#allocation2 + $0x190] sm:$0xff] %v1548
    %1805 = vst [vmem:[#allocation2 + $0x198] sm:$0xff] %v1549
    %1806 = vst [vmem:[#allocation2 + $0x1a0] sm:$0xff] %v1550
    %1807 = vst [vmem:[#allocation2 + $0x1a8] sm:$0xff] %v1551
    %1808 = vst [vmem:[#allocation2 + $0x1b0] sm:$0xff] %v1552
    %1809 = vst [vmem:[#allocation2 + $0x1b8] sm:$0xff] %v1553
    %1810 = vst [vmem:[#allocation2 + $0x1c0] sm:$0xff] %v1554
    %1811 = vst [vmem:[#allocation2 + $0x1c8] sm:$0xff] %v1555
    %1812 = vst [vmem:[#allocation2 + $0x1d0] sm:$0xff] %v1556
    %1813 = vst [vmem:[#allocation2 + $0x1d8] sm:$0xff] %v1557
    %1814 = vst [vmem:[#allocation2 + $0x1e0] sm:$0xff] %v1558
    %1815 = vst [vmem:[#allocation2 + $0x1e8] sm:$0xff] %v1559
    %1816 = vst [vmem:[#allocation2 + $0x1f0] sm:$0xff] %v1560
    %1817 = vst [vmem:[#allocation2 + $0x1f8] sm:$0xff] %v1561
    %1818 = vst [vmem:[#allocation2 + $0x200] sm:$0xff] %v1562
    %1819 = vst [vmem:[#allocation2 + $0x208] sm:$0xff] %v1563
    %1820 = vst [vmem:[#allocation2 + $0x210] sm:$0xff] %v1564
    %1821 = vst [vmem:[#allocation2 + $0x218] sm:$0xff] %v1565
    %1822 = vst [vmem:[#allocation2 + $0x220] sm:$0xff] %v1566
    %1823 = vst [vmem:[#allocation2 + $0x228] sm:$0xff] %v1567
    %1824 = vst [vmem:[#allocation2 + $0x230] sm:$0xff] %v1568
    %1825 = vst [vmem:[#allocation2 + $0x238] sm:$0xff] %v1569
    %1826 = vst [vmem:[#allocation2 + $0x240] sm:$0xff] %v1570
    %1827 = vst [vmem:[#allocation2 + $0x248] sm:$0xff] %v1571
    %1828 = vst [vmem:[#allocation2 + $0x250] sm:$0xff] %v1572
    %1829 = vst [vmem:[#allocation2 + $0x258] sm:$0xff] %v1573
    %1830 = vst [vmem:[#allocation2 + $0x260] sm:$0xff] %v1574
    %1831 = vst [vmem:[#allocation2 + $0x268] sm:$0xff] %v1575
    %1832 = vst [vmem:[#allocation2 + $0x270] sm:$0xff] %v1576
    %1833 = vst [vmem:[#allocation2 + $0x278] sm:$0xff] %v1577
    %1834 = vst [vmem:[#allocation2 + $0x280] sm:$0xff] %v1578
    %1835 = vst [vmem:[#allocation2 + $0x288] sm:$0xff] %v1579
    %1836 = vst [vmem:[#allocation2 + $0x290] sm:$0xff] %v1580
    %1837 = vst [vmem:[#allocation2 + $0x298] sm:$0xff] %v1581
    %1838 = vst [vmem:[#allocation2 + $0x2a0] sm:$0xff] %v1582
    %1839 = vst [vmem:[#allocation2 + $0x2a8] sm:$0xff] %v1583
    %1840 = vst [vmem:[#allocation2 + $0x2b0] sm:$0xff] %v1584
    %1841 = vst [vmem:[#allocation2 + $0x2b8] sm:$0xff] %v1585
    %1842 = vst [vmem:[#allocation2 + $0x2c0] sm:$0xff] %v1586
    %1843 = vst [vmem:[#allocation2 + $0x2c8] sm:$0xff] %v1587
    %1844 = vst [vmem:[#allocation2 + $0x2d0] sm:$0xff] %v1588
    %1845 = vst [vmem:[#allocation2 + $0x2d8] sm:$0xff] %v1589
    %1846 = vst [vmem:[#allocation2 + $0x2e0] sm:$0xff] %v1590
    %1847 = vst [vmem:[#allocation2 + $0x2e8] sm:$0xff] %v1591
    %1848 = vst [vmem:[#allocation2 + $0x2f0] sm:$0xff] %v1592
    %1849 = vst [vmem:[#allocation2 + $0x2f8] sm:$0xff] %v1593
    %1850 = vst [vmem:[#allocation2 + $0x300] sm:$0xff] %v1594
    %1851 = vst [vmem:[#allocation2 + $0x308] sm:$0xff] %v1595
    %1852 = vst [vmem:[#allocation2 + $0x310] sm:$0xff] %v1596
    %1853 = vst [vmem:[#allocation2 + $0x318] sm:$0xff] %v1597
    %1854 = vst [vmem:[#allocation2 + $0x320] sm:$0xff] %v1598
    %1855 = vst [vmem:[#allocation2 + $0x328] sm:$0xff] %v1599
    %1856 = vst [vmem:[#allocation2 + $0x330] sm:$0xff] %v1600
    %1857 = vst [vmem:[#allocation2 + $0x338] sm:$0xff] %v1601
    %1858 = vst [vmem:[#allocation2 + $0x340] sm:$0xff] %v1602
    %1859 = vst [vmem:[#allocation2 + $0x348] sm:$0xff] %v1603
    %1860 = vst [vmem:[#allocation2 + $0x350] sm:$0xff] %v1604
    %1861 = vst [vmem:[#allocation2 + $0x358] sm:$0xff] %v1605
    %1862 = vst [vmem:[#allocation2 + $0x360] sm:$0xff] %v1606
    %1863 = vst [vmem:[#allocation2 + $0x368] sm:$0xff] %v1607
    %1864 = vst [vmem:[#allocation2 + $0x370] sm:$0xff] %v1608
    %1865 = vst [vmem:[#allocation2 + $0x378] sm:$0xff] %v1609
    %1866 = vst [vmem:[#allocation2 + $0x380] sm:$0xff] %v1610
    %1867 = vst [vmem:[#allocation2 + $0x388] sm:$0xff] %v1611
    %1868 = vst [vmem:[#allocation2 + $0x390] sm:$0xff] %v1612
    %1869 = vst [vmem:[#allocation2 + $0x398] sm:$0xff] %v1613
    %1870 = vst [vmem:[#allocation2 + $0x3a0] sm:$0xff] %v1614
    %1871 = vst [vmem:[#allocation2 + $0x3a8] sm:$0xff] %v1615
    %1872 = vst [vmem:[#allocation2 + $0x3b0] sm:$0xff] %v1616
    %1873 = vst [vmem:[#allocation2 + $0x3b8] sm:$0xff] %v1617
    %1874 = vst [vmem:[#allocation2 + $0x3c0] sm:$0xff] %v1618
    %1875 = vst [vmem:[#allocation2 + $0x3c8] sm:$0xff] %v1619
    %1876 = vst [vmem:[#allocation2 + $0x3d0] sm:$0xff] %v1620
    %1877 = vst [vmem:[#allocation2 + $0x3d8] sm:$0xff] %v1621
    %1878 = vst [vmem:[#allocation2 + $0x3e0] sm:$0xff] %v1622
    %1879 = vst [vmem:[#allocation2 + $0x3e8] sm:$0xff] %v1623
    %1880 = vst [vmem:[#allocation2 + $0x3f0] sm:$0xff] %v1624
    %1881 = vst [vmem:[#allocation2 + $0x3f8] sm:$0xff] %v1625
    // Predicated region
    $region14: #{tpu_custom_call.1} parent=1 // pred_check
      _
    $region15: #{tpu_custom_call.1} parent=1 // pred_check_branch
      %1883 = sbr.rel (0) target = $region17
    $region16: #{tpu_custom_call.1} parent=1 // pred_region
      %s1885 = ssub.s32 16384, 16384
      %1886 = vsyncadd [#allocation3], %s1885
      %s1887 = sshll.u32 [#allocation2], 4
      %s1888 = int_to_ptr.vmem [resolvable:$true] %s1887
      %1893 = dma.vmem_to_hbm [thread:$0]  %s1888, 16384, %s3, [#allocation3], 256, 256, 16
    $region17: #{tpu_custom_call.1} parent=1 // pred_fallthru
      _
    // Predicated region
    $region18: #{tpu_custom_call.1} parent=1 // pred_check
      _
    $region19: #{tpu_custom_call.1} parent=1 // pred_check_branch
      %1895 = sbr.rel (0) target = $region21
    $region20: #{tpu_custom_call.1} parent=1 // pred_region
      %1896 = dma.done [#allocation3], 16384
    $region21: #{tpu_custom_call.1} parent=1 // pred_fallthru
      _
    %1897 = vsyncpa [#allocation3], 1

</llo_original>
